<compile_context>
chip_gen: v5e
topology: v5e:2x2
jax: 0.10.0
libtpu: 0.0.40
codegen_flags: <defaults>
</compile_context>

<pallas_src>
import math
import jax
import jax.numpy as jnp
from jax import lax
from jax.experimental import pallas as pl
from jax.experimental.pallas import tpu as pltpu

# ----------------------------- model hyper-parameters -----------------------------
VOCAB      = 64
D_MODEL    = 32
N_HEADS    = 4
N_KV_HEADS = 2
D_HEAD     = D_MODEL // N_HEADS          # 8
D_HIDDEN   = 64
N_LAYERS   = 2
MAX_LEN    = 16
ROPE_BASE  = 10000.0
INIT_STDEV = 0.02
EPS        = 1e-6

HD  = N_HEADS * D_HEAD                   # 32  query width
KVD = N_KV_HEADS * D_HEAD                # 16  key / value width
QKV = HD + 2 * KVD                       # 64  fused q|k|v projection width
REP = N_HEADS // N_KV_HEADS              # 2   GQA replication factor


# =============================== fused decoder kernel ===============================

def _decoder_kernel(ids_ref, cos_ref, sin_ref, prot_ref, emb_ref,
                    attn_nw_ref, wqkv_ref, wo_ref,
                    mlp_nw_ref, wgu_ref, wd_ref,
                    final_nw_ref, wout_ref,
                    logits_ref):
    """One grid step = one batch element; the whole per-sequence forward stays in VMEM.

    ids_ref        (T, 1)   int32     token ids for this sequence
    cos_ref/sin_ref (T, QKV) f32      RoPE tables laid out over fused q|k|v columns
    prot_ref       (QKV, QKV) f32     block-diagonal rotate-half matrix (zero on v cols)
    emb_ref        (VOCAB, D)         token embedding table
    attn_nw/mlp_nw (L, 1, D)          per-layer RMSNorm weights
    wqkv_ref       (L, D, QKV)        fused [Wq | Wk | Wv]
    wo_ref         (L, HD, D)
    wgu_ref        (L, D, 2*D_HIDDEN) fused [Wg | Wu]
    wd_ref         (L, D_HIDDEN, D)
    final_nw_ref   (1, D); wout_ref (D, VOCAB)
    logits_ref     (T, VOCAB)         output
    """
    T = ids_ref.shape[0]
    V, D = emb_ref.shape
    scale = 1.0 / math.sqrt(D_HEAD)

    # ---- InputEmbedding: token gather as a one-hot matmul (MXU).
    #      pos_encoding = identity (RoPE handles positions), dropout = eval no-op ----
    ids = ids_ref[...]                                                     # (T, 1) i32
    onehot = (lax.broadcasted_iota(jnp.int32, (T, V), 1) == ids).astype(jnp.float32)
    x = jnp.dot(onehot, emb_ref[...], preferred_element_type=jnp.float32)  # (T, D)

    cos = cos_ref[...]                                                     # (T, QKV)
    sin = sin_ref[...]
    prot = prot_ref[...]                                                   # (QKV, QKV)

    # causal mask, shared by all heads
    row = lax.broadcasted_iota(jnp.int32, (T, T), 0)
    col = lax.broadcasted_iota(jnp.int32, (T, T), 1)
    causal = col <= row                                                    # (T, T)

    def rmsnorm(h, w):                                                     # h (T,D), w (1,D)
        var = jnp.mean(h * h, axis=-1, keepdims=True)
        return h * lax.rsqrt(var + EPS) * w

    for l in range(N_LAYERS):
        # ---------------- attention sub-block (pre-norm, causal GQA SDPA) ----------
        hn = rmsnorm(x, attn_nw_ref[l])                                    # (T, D)
        qkv = jnp.dot(hn, wqkv_ref[l], preferred_element_type=jnp.float32)  # (T, QKV)
        # RoPE on q and k, identity on v (cos=1 / sin=0 / zero P columns for v):
        qkv = qkv * cos + jnp.dot(qkv, prot,
                                  preferred_element_type=jnp.float32) * sin

        head_outs = []
        for h in range(N_HEADS):                    # unrolled; per-head 2-D matmuls
            kv = h // REP                           # GQA: shared KV head, no repeat
            q = qkv[:, h * D_HEAD:(h + 1) * D_HEAD]                        # (T, dh)
            k = qkv[:, HD + kv * D_HEAD: HD + (kv + 1) * D_HEAD]           # (T, dh)
            v = qkv[:, HD + KVD + kv * D_HEAD: HD + KVD + (kv + 1) * D_HEAD]
            s = lax.dot_general(q, k, (((1,), (1,)), ((), ())),            # q @ k^T
                                preferred_element_type=jnp.float32) * scale
            s = jnp.where(causal, s, -1e30)
            m = jnp.max(s, axis=-1, keepdims=True)
            p = jnp.exp(s - m)
            denom = jnp.sum(p, axis=-1, keepdims=True)
            o = jnp.dot(p, v, preferred_element_type=jnp.float32) / denom  # (T, dh)
            head_outs.append(o)
        attn_out = jnp.concatenate(head_outs, axis=-1)                     # (T, HD)

        x = x + jnp.dot(attn_out, wo_ref[l], preferred_element_type=jnp.float32)

        # ---------------- MLP sub-block (pre-norm, SwiGLU) ----------------
        hn2 = rmsnorm(x, mlp_nw_ref[l])
        gu = jnp.dot(hn2, wgu_ref[l], preferred_element_type=jnp.float32)   # (T, 2*HID)
        g = gu[:, :D_HIDDEN]
        u = gu[:, D_HIDDEN:]
        x = x + jnp.dot(g * jax.nn.sigmoid(g) * u, wd_ref[l],
                        preferred_element_type=jnp.float32)

    # ---------------- LM head: RMSNorm + unbiased projection ----------------
    xn = rmsnorm(x, final_nw_ref[...])
    logits_ref[...] = jnp.dot(xn, wout_ref[...],
                              preferred_element_type=jnp.float32).astype(logits_ref.dtype)


def decoder_forward_pallas(packed, input_ids):
    """input_ids: (B, T) int32 -> logits (B, T, VOCAB) float32.  One pallas_call total."""
    B, T = input_ids.shape
    ids3 = input_ids.astype(jnp.int32).reshape(B, T, 1)
    cos = packed['cos'][:T]                                               # (T, QKV)
    sin = packed['sin'][:T]

    wspec2 = lambda shape: pl.BlockSpec(shape, lambda b: (0, 0))
    wspec3 = lambda shape: pl.BlockSpec(shape, lambda b: (0, 0, 0))

    return pl.pallas_call(
        _decoder_kernel,
        out_shape=jax.ShapeDtypeStruct((B, T, VOCAB), jnp.float32),
        grid=(B,),
        in_specs=[
            pl.BlockSpec((None, T, 1), lambda b: (b, 0, 0)),              # ids
            wspec2((T, QKV)),                                             # cos
            wspec2((T, QKV)),                                             # sin
            wspec2((QKV, QKV)),                                           # P_rope
            wspec2((VOCAB, D_MODEL)),                                     # tok_embed
            wspec3((N_LAYERS, 1, D_MODEL)),                               # attn_norm_w
            wspec3((N_LAYERS, D_MODEL, QKV)),                             # wqkv
            wspec3((N_LAYERS, HD, D_MODEL)),                              # wo
            wspec3((N_LAYERS, 1, D_MODEL)),                               # mlp_norm_w
            wspec3((N_LAYERS, D_MODEL, 2 * D_HIDDEN)),                    # wgu
            wspec3((N_LAYERS, D_HIDDEN, D_MODEL)),                        # wd
            wspec2((1, D_MODEL)),                                         # final_norm_w
            wspec2((D_MODEL, VOCAB)),                                     # w_out
        ],
        out_specs=pl.BlockSpec((None, T, VOCAB), lambda b: (b, 0, 0)),
        compiler_params=pltpu.CompilerParams(
            dimension_semantics=("parallel",)),                           # v7x: 2 TCs
    )(ids3, cos, sin, packed['p_rope'], packed['tok_embed'],
      packed['attn_norm_w'], packed['wqkv'], packed['wo'],
      packed['mlp_norm_w'], packed['wgu'], packed['wd'],
      packed['final_norm_w'], packed['w_out'])


# ============================ parameter init & packing ============================

def init_params(key):
    n_per_layer = 7
    keys = jax.random.split(key, 2 + N_LAYERS * n_per_layer)
    nrm = lambda k, shape: INIT_STDEV * jax.random.normal(k, shape, jnp.float32)
    params = {
        'tok_embed': nrm(keys[0], (VOCAB, D_MODEL)),
        'final_norm_w': jnp.ones((D_MODEL,), jnp.float32),
        'w_out': nrm(keys[1], (D_MODEL, VOCAB)),
        'layers': [],
    }
    for l in range(N_LAYERS):
        k = keys[2 + l * n_per_layer: 2 + (l + 1) * n_per_layer]
        params['layers'].append({
            'attn_norm_w': jnp.ones((D_MODEL,), jnp.float32),
            'mlp_norm_w':  jnp.ones((D_MODEL,), jnp.float32),
            'wq': nrm(k[0], (D_MODEL, HD)),
            'wk': nrm(k[1], (D_MODEL, KVD)),
            'wv': nrm(k[2], (D_MODEL, KVD)),
            'wo': nrm(k[3], (HD, D_MODEL)),
            'wg': nrm(k[4], (D_MODEL, D_HIDDEN)),
            'wu': nrm(k[5], (D_MODEL, D_HIDDEN)),
            'wd': nrm(k[6], (D_HIDDEN, D_MODEL)),
        })
    return params


def rope_tables(T):
    """Rotate-half RoPE tables with duplicated halves: cos/sin of shape (T, D_HEAD)."""
    inv = 1.0 / (ROPE_BASE ** (jnp.arange(0, D_HEAD, 2, dtype=jnp.float32) / D_HEAD))
    t = jnp.arange(T, dtype=jnp.float32)
    freqs = jnp.outer(t, inv)                                             # (T, dh/2)
    cos = jnp.concatenate([jnp.cos(freqs), jnp.cos(freqs)], axis=-1)
    sin = jnp.concatenate([jnp.sin(freqs), jnp.sin(freqs)], axis=-1)
    return cos, sin


def _rotate_half_matrix(dh):
    """P such that (u @ P) == rotate_half(u) == concat([-u2, u1]) for one head."""
    half = dh // 2
    P = jnp.zeros((dh, dh), jnp.float32)
    P = P.at[jnp.arange(half) + half, jnp.arange(half)].set(-1.0)
    P = P.at[jnp.arange(half), jnp.arange(half) + half].set(1.0)
    return P


def pack_params(params, max_len=MAX_LEN):
    """One-time host-side packing into fused / stacked arrays for the fused kernel."""
    wqkv = jnp.stack([jnp.concatenate([p['wq'], p['wk'], p['wv']], axis=1)
                      for p in params['layers']])                          # (L, D, QKV)
    wgu = jnp.stack([jnp.concatenate([p['wg'], p['wu']], axis=1)
                     for p in params['layers']])                           # (L, D, 2*HID)
    wo = jnp.stack([p['wo'] for p in params['layers']])                    # (L, HD, D)
    wd = jnp.stack([p['wd'] for p in params['layers']])                    # (L, HID, D)
    attn_nw = jnp.stack([p['attn_norm_w'].reshape(1, -1) for p in params['layers']])
    mlp_nw = jnp.stack([p['mlp_norm_w'].reshape(1, -1) for p in params['layers']])

    # RoPE tables laid out over the fused q|k|v columns (v gets cos=1 / sin=0).
    cos_f, sin_f = rope_tables(max_len)                                    # (max_len, dh)
    cos_qkv = jnp.concatenate([jnp.tile(cos_f, (1, N_HEADS)),
                               jnp.tile(cos_f, (1, N_KV_HEADS)),
                               jnp.ones((max_len, KVD), jnp.float32)], axis=1)
    sin_qkv = jnp.concatenate([jnp.tile(sin_f, (1, N_HEADS)),
                               jnp.tile(sin_f, (1, N_KV_HEADS)),
                               jnp.zeros((max_len, KVD), jnp.float32)], axis=1)

    # Block-diagonal rotate-half matrix over [q | k | v] columns (zero block for v).
    P8 = _rotate_half_matrix(D_HEAD)
    p_rope = jnp.zeros((QKV, QKV), jnp.float32)
    p_rope = p_rope.at[:HD, :HD].set(jnp.kron(jnp.eye(N_HEADS, dtype=jnp.float32), P8))
    p_rope = p_rope.at[HD:HD + KVD, HD:HD + KVD].set(
        jnp.kron(jnp.eye(N_KV_HEADS, dtype=jnp.float32), P8))

    return dict(tok_embed=params['tok_embed'],
                w_out=params['w_out'],
                final_norm_w=params['final_norm_w'].reshape(1, -1),
                attn_norm_w=attn_nw, mlp_norm_w=mlp_nw,
                wqkv=wqkv, wo=wo, wgu=wgu, wd=wd,
                cos=cos_qkv, sin=sin_qkv, p_rope=p_rope)


# =============================== pure-JAX reference ===============================

def _ref_rmsnorm(x, w):
    var = jnp.mean(x * x, axis=-1, keepdims=True)
    return x * lax.rsqrt(var + EPS) * w


def _ref_rope(x, cos, sin):                       # x: (B, H, T, dh)
    half = D_HEAD // 2
    x1, x2 = x[..., :half], x[..., half:]
    rot = jnp.concatenate([-x2, x1], axis=-1)
    return x * cos[None, None] + rot * sin[None, None]


def decoder_forward_ref(params, input_ids):
    B, T = input_ids.shape
    x = jnp.take(params['tok_embed'], input_ids, axis=0)                  # (B, T, D)
    cos, sin = rope_tables(T)
    mask = jnp.tril(jnp.ones((T, T), dtype=bool))
    for p in params['layers']:
        h = _ref_rmsnorm(x, p['attn_norm_w'])
        q = (h @ p['wq']).reshape(B, T, N_HEADS, D_HEAD).transpose(0, 2, 1, 3)
        k = (h @ p['wk']).reshape(B, T, N_KV_HEADS, D_HEAD).transpose(0, 2, 1, 3)
        v = (h @ p['wv']).reshape(B, T, N_KV_HEADS, D_HEAD).transpose(0, 2, 1, 3)
        q = _ref_rope(q, cos, sin)
        k = _ref_rope(k, cos, sin)
        k = jnp.repeat(k, REP, axis=1)                                    # GQA expand
        v = jnp.repeat(v, REP, axis=1)
        s = jnp.einsum('bhqd,bhkd->bhqk', q, k) / math.sqrt(D_HEAD)
        s = jnp.where(mask, s, -1e30)
        a = jax.nn.softmax(s, axis=-1)
        o = jnp.einsum('bhqk,bhkd->bhqd', a, v)
        o = o.transpose(0, 2, 1, 3).reshape(B, T, HD)
        x = x + o @ p['wo']
        h2 = _ref_rmsnorm(x, p['mlp_norm_w'])
        g = h2 @ p['wg']
        u = h2 @ p['wu']
        x = x + (g * jax.nn.sigmoid(g) * u) @ p['wd']
    xn = _ref_rmsnorm(x, params['final_norm_w'])
    return xn @ params['w_out']


# ======================================= main =========================================

if __name__ == "__main__":
    key = jax.random.PRNGKey(0)
    pkey, ikey = jax.random.split(key)
    params = init_params(pkey)
    packed = pack_params(params)                      # one-time packing (hoisted)

    B, T = 2, 8
    input_ids = jax.random.randint(ikey, (B, T), 0, VOCAB, dtype=jnp.int32)

    fwd = jax.jit(decoder_forward_pallas)
    logits = jax.block_until_ready(fwd(packed, input_ids))

    ref_logits = jax.block_until_ready(jax.jit(decoder_forward_ref)(params, input_ids))

    assert logits.shape == (B, T, VOCAB) and logits.dtype == jnp.float32
    assert bool(jnp.all(jnp.isfinite(logits)))
    # Exact softmax division is used in-kernel; remaining differences vs. the reference
    # are MXU accumulation-order rounding only.
    assert bool(jnp.allclose(logits, ref_logits, atol=1e-3, rtol=1e-3))

    # TODO(synk): KV-cache / incremental-decoding path (cache is not None) not implemented;
    # this kernel covers the full-sequence training/eval forward (cache=None), like the ref.
    print("KERNEL_OK")
</pallas_src>

<mosaic_0001>
module attributes {stable_mosaic.version = 11 : i64} {
  func.func @_decoder_kernel(%arg0: i32, %arg1: memref<1x8x1xi32, #tpu.memory_space<vmem>>, %arg2: memref<8x64xf32, #tpu.memory_space<vmem>>, %arg3: memref<8x64xf32, #tpu.memory_space<vmem>>, %arg4: memref<64x64xf32, #tpu.memory_space<vmem>>, %arg5: memref<64x32xf32, #tpu.memory_space<vmem>>, %arg6: memref<2x1x32xf32, #tpu.memory_space<vmem>>, %arg7: memref<2x32x64xf32, #tpu.memory_space<vmem>>, %arg8: memref<2x32x32xf32, #tpu.memory_space<vmem>>, %arg9: memref<2x1x32xf32, #tpu.memory_space<vmem>>, %arg10: memref<2x32x128xf32, #tpu.memory_space<vmem>>, %arg11: memref<2x64x32xf32, #tpu.memory_space<vmem>>, %arg12: memref<1x32xf32, #tpu.memory_space<vmem>>, %arg13: memref<32x64xf32, #tpu.memory_space<vmem>>, %arg14: memref<1x8x64xf32, #tpu.memory_space<vmem>>) attributes {dimension_semantics = [#tpu.dimension_semantics<parallel>], iteration_bounds = array<i64: 2>, scalar_prefetch = 0 : i64, scratch_operands = 0 : i64, tpu.core_type = #tpu.core_type<tc>, window_params = [{transform_indices = @transform_0, window_bounds = array<i64: 1, 8, 1>}, {pipeline_mode = #tpu.pipeline_mode<synchronous>, transform_indices = @transform_1, window_bounds = array<i64: 8, 64>}, {pipeline_mode = #tpu.pipeline_mode<synchronous>, transform_indices = @transform_2, window_bounds = array<i64: 8, 64>}, {pipeline_mode = #tpu.pipeline_mode<synchronous>, transform_indices = @transform_3, window_bounds = array<i64: 64, 64>}, {pipeline_mode = #tpu.pipeline_mode<synchronous>, transform_indices = @transform_4, window_bounds = array<i64: 64, 32>}, {pipeline_mode = #tpu.pipeline_mode<synchronous>, transform_indices = @transform_5, window_bounds = array<i64: 2, 1, 32>}, {pipeline_mode = #tpu.pipeline_mode<synchronous>, transform_indices = @transform_6, window_bounds = array<i64: 2, 32, 64>}, {pipeline_mode = #tpu.pipeline_mode<synchronous>, transform_indices = @transform_7, window_bounds = array<i64: 2, 32, 32>}, {pipeline_mode = #tpu.pipeline_mode<synchronous>, transform_indices = @transform_8, window_bounds = array<i64: 2, 1, 32>}, {pipeline_mode = #tpu.pipeline_mode<synchronous>, transform_indices = @transform_9, window_bounds = array<i64: 2, 32, 128>}, {pipeline_mode = #tpu.pipeline_mode<synchronous>, transform_indices = @transform_10, window_bounds = array<i64: 2, 64, 32>}, {pipeline_mode = #tpu.pipeline_mode<synchronous>, transform_indices = @transform_11, window_bounds = array<i64: 1, 32>}, {pipeline_mode = #tpu.pipeline_mode<synchronous>, transform_indices = @transform_12, window_bounds = array<i64: 32, 64>}, {transform_indices = @transform_13, window_bounds = array<i64: 1, 8, 64>}]} {
    %c0 = arith.constant 0 : index
    %c0_0 = arith.constant 0 : index
    %c0_1 = arith.constant 0 : index
    %0 = vector.load %arg1[%c0, %c0_0, %c0_1] : memref<1x8x1xi32, #tpu.memory_space<vmem>>, vector<1x8x1xi32>
    %1 = vector.shape_cast %0 : vector<1x8x1xi32> to vector<8x1xi32>
    %2 = tpu.iota {dimensions = array<i32: 1>} : vector<8x64xi32>
    %3 = vector.broadcast %1 : vector<8x1xi32> to vector<8x64xi32>
    %4 = arith.cmpi eq, %2, %3 : vector<8x64xi32>
    %5 = arith.extui %4 : vector<8x64xi1> to vector<8x64xi32>
    %6 = arith.sitofp %5 : vector<8x64xi32> to vector<8x64xf32>
    %c0_2 = arith.constant 0 : index
    %c0_3 = arith.constant 0 : index
    %7 = vector.load %arg5[%c0_2, %c0_3] : memref<64x32xf32, #tpu.memory_space<vmem>>, vector<64x32xf32>
    %cst = arith.constant dense<0.000000e+00> : vector<8x32xf32>
    %8 = tpu.matmul %6, %7, %cst {dimension_numbers = #tpu.dot_dimension_numbers<[1], [0], [0], [1], [0, 0, 1, 1], [], []>} : vector<8x64xf32>, vector<64x32xf32>, vector<8x32xf32> -> vector<8x32xf32>
    %c0_4 = arith.constant 0 : index
    %c0_5 = arith.constant 0 : index
    %9 = vector.load %arg2[%c0_4, %c0_5] : memref<8x64xf32, #tpu.memory_space<vmem>>, vector<8x64xf32>
    %c0_6 = arith.constant 0 : index
    %c0_7 = arith.constant 0 : index
    %10 = vector.load %arg3[%c0_6, %c0_7] : memref<8x64xf32, #tpu.memory_space<vmem>>, vector<8x64xf32>
    %c0_8 = arith.constant 0 : index
    %c0_9 = arith.constant 0 : index
    %11 = vector.load %arg4[%c0_8, %c0_9] : memref<64x64xf32, #tpu.memory_space<vmem>>, vector<64x64xf32>
    %12 = tpu.iota {dimensions = array<i32: 0>} : vector<8x8xi32>
    %13 = tpu.iota {dimensions = array<i32: 1>} : vector<8x8xi32>
    %14 = arith.cmpi sle, %13, %12 : vector<8x8xi32>
    %c0_10 = arith.constant 0 : index
    %c0_11 = arith.constant 0 : index
    %c0_12 = arith.constant 0 : index
    %15 = vector.load %arg6[%c0_10, %c0_11, %c0_12] : memref<2x1x32xf32, #tpu.memory_space<vmem>>, vector<1x1x32xf32>
    %16 = vector.shape_cast %15 : vector<1x1x32xf32> to vector<1x32xf32>
    %17 = arith.mulf %8, %8 : vector<8x32xf32>
    %cst_13 = arith.constant dense<0.000000e+00> : vector<8xf32>
    %18 = vector.multi_reduction <add>, %17, %cst_13 [1] : vector<8x32xf32> to vector<8xf32>
    %19 = vector.shape_cast %18 : vector<8xf32> to vector<8x1xf32>
    %cst_14 = arith.constant 3.200000e+01 : f32
    %20 = vector.broadcast %cst_14 : f32 to vector<8x1xf32>
    %21 = arith.divf %19, %20 : vector<8x1xf32>
    %cst_15 = arith.constant 9.99999997E-7 : f32
    %22 = vector.broadcast %cst_15 : f32 to vector<8x1xf32>
    %23 = arith.addf %21, %22 : vector<8x1xf32>
    %24 = math.rsqrt %23 : vector<8x1xf32>
    %25 = vector.broadcast %24 : vector<8x1xf32> to vector<8x32xf32>
    %26 = arith.mulf %8, %25 : vector<8x32xf32>
    %27 = vector.broadcast %16 : vector<1x32xf32> to vector<8x32xf32>
    %28 = arith.mulf %26, %27 : vector<8x32xf32>
    %c0_16 = arith.constant 0 : index
    %c0_17 = arith.constant 0 : index
    %c0_18 = arith.constant 0 : index
    %29 = vector.load %arg7[%c0_16, %c0_17, %c0_18] : memref<2x32x64xf32, #tpu.memory_space<vmem>>, vector<1x32x64xf32>
    %30 = vector.shape_cast %29 : vector<1x32x64xf32> to vector<32x64xf32>
    %cst_19 = arith.constant dense<0.000000e+00> : vector<8x64xf32>
    %31 = tpu.matmul %28, %30, %cst_19 {dimension_numbers = #tpu.dot_dimension_numbers<[1], [0], [0], [1], [0, 0, 1, 1], [], []>} : vector<8x32xf32>, vector<32x64xf32>, vector<8x64xf32> -> vector<8x64xf32>
    %32 = arith.mulf %31, %9 : vector<8x64xf32>
    %cst_20 = arith.constant dense<0.000000e+00> : vector<8x64xf32>
    %33 = tpu.matmul %31, %11, %cst_20 {dimension_numbers = #tpu.dot_dimension_numbers<[1], [0], [0], [1], [0, 0, 1, 1], [], []>} : vector<8x64xf32>, vector<64x64xf32>, vector<8x64xf32> -> vector<8x64xf32>
    %34 = arith.mulf %33, %10 : vector<8x64xf32>
    %35 = arith.addf %32, %34 : vector<8x64xf32>
    %36 = vector.extract_strided_slice %35 {offsets = [0, 0], sizes = [8, 8], strides = [1, 1]} : vector<8x64xf32> to vector<8x8xf32>
    %37 = vector.extract_strided_slice %35 {offsets = [0, 32], sizes = [8, 8], strides = [1, 1]} : vector<8x64xf32> to vector<8x8xf32>
    %38 = vector.extract_strided_slice %35 {offsets = [0, 48], sizes = [8, 8], strides = [1, 1]} : vector<8x64xf32> to vector<8x8xf32>
    %cst_21 = arith.constant dense<0.000000e+00> : vector<8x8xf32>
    %39 = tpu.matmul %36, %37, %cst_21 {dimension_numbers = #tpu.dot_dimension_numbers<[1], [1], [0], [0], [0, 0, 1, 0], [], []>} : vector<8x8xf32>, vector<8x8xf32>, vector<8x8xf32> -> vector<8x8xf32>
    %cst_22 = arith.constant 0.353553385 : f32
    %40 = vector.broadcast %cst_22 : f32 to vector<8x8xf32>
    %41 = arith.mulf %39, %40 : vector<8x8xf32>
    %cst_23 = arith.constant -1.000000e+30 : f32
    %42 = vector.broadcast %cst_23 : f32 to vector<8x8xf32>
    %43 = arith.select %14, %41, %42 : vector<8x8xi1>, vector<8x8xf32>
    %cst_24 = arith.constant dense<0xFF800000> : vector<8xf32>
    %44 = vector.multi_reduction <maximumf>, %43, %cst_24 [1] : vector<8x8xf32> to vector<8xf32>
    %45 = vector.shape_cast %44 : vector<8xf32> to vector<8x1xf32>
    %46 = vector.broadcast %45 : vector<8x1xf32> to vector<8x8xf32>
    %47 = arith.subf %43, %46 : vector<8x8xf32>
    %48 = math.exp %47 : vector<8x8xf32>
    %cst_25 = arith.constant dense<0.000000e+00> : vector<8xf32>
    %49 = vector.multi_reduction <add>, %48, %cst_25 [1] : vector<8x8xf32> to vector<8xf32>
    %50 = vector.shape_cast %49 : vector<8xf32> to vector<8x1xf32>
    %cst_26 = arith.constant dense<0.000000e+00> : vector<8x8xf32>
    %51 = tpu.matmul %48, %38, %cst_26 {dimension_numbers = #tpu.dot_dimension_numbers<[1], [0], [0], [1], [0, 0, 1, 1], [], []>} : vector<8x8xf32>, vector<8x8xf32>, vector<8x8xf32> -> vector<8x8xf32>
    %52 = vector.broadcast %50 : vector<8x1xf32> to vector<8x8xf32>
    %53 = arith.divf %51, %52 : vector<8x8xf32>
    %54 = vector.extract_strided_slice %35 {offsets = [0, 8], sizes = [8, 8], strides = [1, 1]} : vector<8x64xf32> to vector<8x8xf32>
    %55 = vector.extract_strided_slice %35 {offsets = [0, 32], sizes = [8, 8], strides = [1, 1]} : vector<8x64xf32> to vector<8x8xf32>
    %56 = vector.extract_strided_slice %35 {offsets = [0, 48], sizes = [8, 8], strides = [1, 1]} : vector<8x64xf32> to vector<8x8xf32>
    %cst_27 = arith.constant dense<0.000000e+00> : vector<8x8xf32>
    %57 = tpu.matmul %54, %55, %cst_27 {dimension_numbers = #tpu.dot_dimension_numbers<[1], [1], [0], [0], [0, 0, 1, 0], [], []>} : vector<8x8xf32>, vector<8x8xf32>, vector<8x8xf32> -> vector<8x8xf32>
    %cst_28 = arith.constant 0.353553385 : f32
    %58 = vector.broadcast %cst_28 : f32 to vector<8x8xf32>
    %59 = arith.mulf %57, %58 : vector<8x8xf32>
    %cst_29 = arith.constant -1.000000e+30 : f32
    %60 = vector.broadcast %cst_29 : f32 to vector<8x8xf32>
    %61 = arith.select %14, %59, %60 : vector<8x8xi1>, vector<8x8xf32>
    %cst_30 = arith.constant dense<0xFF800000> : vector<8xf32>
    %62 = vector.multi_reduction <maximumf>, %61, %cst_30 [1] : vector<8x8xf32> to vector<8xf32>
    %63 = vector.shape_cast %62 : vector<8xf32> to vector<8x1xf32>
    %64 = vector.broadcast %63 : vector<8x1xf32> to vector<8x8xf32>
    %65 = arith.subf %61, %64 : vector<8x8xf32>
    %66 = math.exp %65 : vector<8x8xf32>
    %cst_31 = arith.constant dense<0.000000e+00> : vector<8xf32>
    %67 = vector.multi_reduction <add>, %66, %cst_31 [1] : vector<8x8xf32> to vector<8xf32>
    %68 = vector.shape_cast %67 : vector<8xf32> to vector<8x1xf32>
    %cst_32 = arith.constant dense<0.000000e+00> : vector<8x8xf32>
    %69 = tpu.matmul %66, %56, %cst_32 {dimension_numbers = #tpu.dot_dimension_numbers<[1], [0], [0], [1], [0, 0, 1, 1], [], []>} : vector<8x8xf32>, vector<8x8xf32>, vector<8x8xf32> -> vector<8x8xf32>
    %70 = vector.broadcast %68 : vector<8x1xf32> to vector<8x8xf32>
    %71 = arith.divf %69, %70 : vector<8x8xf32>
    %72 = vector.extract_strided_slice %35 {offsets = [0, 16], sizes = [8, 8], strides = [1, 1]} : vector<8x64xf32> to vector<8x8xf32>
    %73 = vector.extract_strided_slice %35 {offsets = [0, 40], sizes = [8, 8], strides = [1, 1]} : vector<8x64xf32> to vector<8x8xf32>
    %74 = vector.extract_strided_slice %35 {offsets = [0, 56], sizes = [8, 8], strides = [1, 1]} : vector<8x64xf32> to vector<8x8xf32>
    %cst_33 = arith.constant dense<0.000000e+00> : vector<8x8xf32>
    %75 = tpu.matmul %72, %73, %cst_33 {dimension_numbers = #tpu.dot_dimension_numbers<[1], [1], [0], [0], [0, 0, 1, 0], [], []>} : vector<8x8xf32>, vector<8x8xf32>, vector<8x8xf32> -> vector<8x8xf32>
    %cst_34 = arith.constant 0.353553385 : f32
    %76 = vector.broadcast %cst_34 : f32 to vector<8x8xf32>
    %77 = arith.mulf %75, %76 : vector<8x8xf32>
    %cst_35 = arith.constant -1.000000e+30 : f32
    %78 = vector.broadcast %cst_35 : f32 to vector<8x8xf32>
    %79 = arith.select %14, %77, %78 : vector<8x8xi1>, vector<8x8xf32>
    %cst_36 = arith.constant dense<0xFF800000> : vector<8xf32>
    %80 = vector.multi_reduction <maximumf>, %79, %cst_36 [1] : vector<8x8xf32> to vector<8xf32>
    %81 = vector.shape_cast %80 : vector<8xf32> to vector<8x1xf32>
    %82 = vector.broadcast %81 : vector<8x1xf32> to vector<8x8xf32>
    %83 = arith.subf %79, %82 : vector<8x8xf32>
    %84 = math.exp %83 : vector<8x8xf32>
    %cst_37 = arith.constant dense<0.000000e+00> : vector<8xf32>
    %85 = vector.multi_reduction <add>, %84, %cst_37 [1] : vector<8x8xf32> to vector<8xf32>
    %86 = vector.shape_cast %85 : vector<8xf32> to vector<8x1xf32>
    %cst_38 = arith.constant dense<0.000000e+00> : vector<8x8xf32>
    %87 = tpu.matmul %84, %74, %cst_38 {dimension_numbers = #tpu.dot_dimension_numbers<[1], [0], [0], [1], [0, 0, 1, 1], [], []>} : vector<8x8xf32>, vector<8x8xf32>, vector<8x8xf32> -> vector<8x8xf32>
    %88 = vector.broadcast %86 : vector<8x1xf32> to vector<8x8xf32>
    %89 = arith.divf %87, %88 : vector<8x8xf32>
    %90 = vector.extract_strided_slice %35 {offsets = [0, 24], sizes = [8, 8], strides = [1, 1]} : vector<8x64xf32> to vector<8x8xf32>
    %91 = vector.extract_strided_slice %35 {offsets = [0, 40], sizes = [8, 8], strides = [1, 1]} : vector<8x64xf32> to vector<8x8xf32>
    %92 = vector.extract_strided_slice %35 {offsets = [0, 56], sizes = [8, 8], strides = [1, 1]} : vector<8x64xf32> to vector<8x8xf32>
    %cst_39 = arith.constant dense<0.000000e+00> : vector<8x8xf32>
    %93 = tpu.matmul %90, %91, %cst_39 {dimension_numbers = #tpu.dot_dimension_numbers<[1], [1], [0], [0], [0, 0, 1, 0], [], []>} : vector<8x8xf32>, vector<8x8xf32>, vector<8x8xf32> -> vector<8x8xf32>
    %cst_40 = arith.constant 0.353553385 : f32
    %94 = vector.broadcast %cst_40 : f32 to vector<8x8xf32>
    %95 = arith.mulf %93, %94 : vector<8x8xf32>
    %cst_41 = arith.constant -1.000000e+30 : f32
    %96 = vector.broadcast %cst_41 : f32 to vector<8x8xf32>
    %97 = arith.select %14, %95, %96 : vector<8x8xi1>, vector<8x8xf32>
    %cst_42 = arith.constant dense<0xFF800000> : vector<8xf32>
    %98 = vector.multi_reduction <maximumf>, %97, %cst_42 [1] : vector<8x8xf32> to vector<8xf32>
    %99 = vector.shape_cast %98 : vector<8xf32> to vector<8x1xf32>
    %100 = vector.broadcast %99 : vector<8x1xf32> to vector<8x8xf32>
    %101 = arith.subf %97, %100 : vector<8x8xf32>
    %102 = math.exp %101 : vector<8x8xf32>
    %cst_43 = arith.constant dense<0.000000e+00> : vector<8xf32>
    %103 = vector.multi_reduction <add>, %102, %cst_43 [1] : vector<8x8xf32> to vector<8xf32>
    %104 = vector.shape_cast %103 : vector<8xf32> to vector<8x1xf32>
    %cst_44 = arith.constant dense<0.000000e+00> : vector<8x8xf32>
    %105 = tpu.matmul %102, %92, %cst_44 {dimension_numbers = #tpu.dot_dimension_numbers<[1], [0], [0], [1], [0, 0, 1, 1], [], []>} : vector<8x8xf32>, vector<8x8xf32>, vector<8x8xf32> -> vector<8x8xf32>
    %106 = vector.broadcast %104 : vector<8x1xf32> to vector<8x8xf32>
    %107 = arith.divf %105, %106 : vector<8x8xf32>
    %108 = tpu.concatenate %53, %71, %89, %107 in 1 : vector<8x8xf32>, vector<8x8xf32>, vector<8x8xf32>, vector<8x8xf32> -> vector<8x32xf32>
    %c0_45 = arith.constant 0 : index
    %c0_46 = arith.constant 0 : index
    %c0_47 = arith.constant 0 : index
    %109 = vector.load %arg8[%c0_45, %c0_46, %c0_47] : memref<2x32x32xf32, #tpu.memory_space<vmem>>, vector<1x32x32xf32>
    %110 = vector.shape_cast %109 : vector<1x32x32xf32> to vector<32x32xf32>
    %cst_48 = arith.constant dense<0.000000e+00> : vector<8x32xf32>
    %111 = tpu.matmul %108, %110, %cst_48 {dimension_numbers = #tpu.dot_dimension_numbers<[1], [0], [0], [1], [0, 0, 1, 1], [], []>} : vector<8x32xf32>, vector<32x32xf32>, vector<8x32xf32> -> vector<8x32xf32>
    %112 = arith.addf %8, %111 : vector<8x32xf32>
    %c0_49 = arith.constant 0 : index
    %c0_50 = arith.constant 0 : index
    %c0_51 = arith.constant 0 : index
    %113 = vector.load %arg9[%c0_49, %c0_50, %c0_51] : memref<2x1x32xf32, #tpu.memory_space<vmem>>, vector<1x1x32xf32>
    %114 = vector.shape_cast %113 : vector<1x1x32xf32> to vector<1x32xf32>
    %115 = arith.mulf %112, %112 : vector<8x32xf32>
    %cst_52 = arith.constant dense<0.000000e+00> : vector<8xf32>
    %116 = vector.multi_reduction <add>, %115, %cst_52 [1] : vector<8x32xf32> to vector<8xf32>
    %117 = vector.shape_cast %116 : vector<8xf32> to vector<8x1xf32>
    %cst_53 = arith.constant 3.200000e+01 : f32
    %118 = vector.broadcast %cst_53 : f32 to vector<8x1xf32>
    %119 = arith.divf %117, %118 : vector<8x1xf32>
    %cst_54 = arith.constant 9.99999997E-7 : f32
    %120 = vector.broadcast %cst_54 : f32 to vector<8x1xf32>
    %121 = arith.addf %119, %120 : vector<8x1xf32>
    %122 = math.rsqrt %121 : vector<8x1xf32>
    %123 = vector.broadcast %122 : vector<8x1xf32> to vector<8x32xf32>
    %124 = arith.mulf %112, %123 : vector<8x32xf32>
    %125 = vector.broadcast %114 : vector<1x32xf32> to vector<8x32xf32>
    %126 = arith.mulf %124, %125 : vector<8x32xf32>
    %c0_55 = arith.constant 0 : index
    %c0_56 = arith.constant 0 : index
    %c0_57 = arith.constant 0 : index
    %127 = vector.load %arg10[%c0_55, %c0_56, %c0_57] : memref<2x32x128xf32, #tpu.memory_space<vmem>>, vector<1x32x128xf32>
    %128 = vector.shape_cast %127 : vector<1x32x128xf32> to vector<32x128xf32>
    %cst_58 = arith.constant dense<0.000000e+00> : vector<8x128xf32>
    %129 = tpu.matmul %126, %128, %cst_58 {dimension_numbers = #tpu.dot_dimension_numbers<[1], [0], [0], [1], [0, 0, 1, 1], [], []>} : vector<8x32xf32>, vector<32x128xf32>, vector<8x128xf32> -> vector<8x128xf32>
    %130 = vector.extract_strided_slice %129 {offsets = [0, 0], sizes = [8, 64], strides = [1, 1]} : vector<8x128xf32> to vector<8x64xf32>
    %131 = vector.extract_strided_slice %129 {offsets = [0, 64], sizes = [8, 64], strides = [1, 1]} : vector<8x128xf32> to vector<8x64xf32>
    %132 = arith.negf %130 : vector<8x64xf32>
    %133 = math.exp %132 : vector<8x64xf32>
    %cst_59 = arith.constant 1.000000e+00 : f32
    %134 = vector.broadcast %cst_59 : f32 to vector<8x64xf32>
    %135 = arith.addf %134, %133 : vector<8x64xf32>
    %136 = arith.divf %134, %135 : vector<8x64xf32>
    %137 = arith.mulf %130, %136 : vector<8x64xf32>
    %138 = arith.mulf %137, %131 : vector<8x64xf32>
    %c0_60 = arith.constant 0 : index
    %c0_61 = arith.constant 0 : index
    %c0_62 = arith.constant 0 : index
    %139 = vector.load %arg11[%c0_60, %c0_61, %c0_62] : memref<2x64x32xf32, #tpu.memory_space<vmem>>, vector<1x64x32xf32>
    %140 = vector.shape_cast %139 : vector<1x64x32xf32> to vector<64x32xf32>
    %cst_63 = arith.constant dense<0.000000e+00> : vector<8x32xf32>
    %141 = tpu.matmul %138, %140, %cst_63 {dimension_numbers = #tpu.dot_dimension_numbers<[1], [0], [0], [1], [0, 0, 1, 1], [], []>} : vector<8x64xf32>, vector<64x32xf32>, vector<8x32xf32> -> vector<8x32xf32>
    %142 = arith.addf %112, %141 : vector<8x32xf32>
    %c1 = arith.constant 1 : index
    %c0_64 = arith.constant 0 : index
    %c0_65 = arith.constant 0 : index
    %143 = vector.load %arg6[%c1, %c0_64, %c0_65] : memref<2x1x32xf32, #tpu.memory_space<vmem>>, vector<1x1x32xf32>
    %144 = vector.shape_cast %143 : vector<1x1x32xf32> to vector<1x32xf32>
    %145 = arith.mulf %142, %142 : vector<8x32xf32>
    %cst_66 = arith.constant dense<0.000000e+00> : vector<8xf32>
    %146 = vector.multi_reduction <add>, %145, %cst_66 [1] : vector<8x32xf32> to vector<8xf32>
    %147 = vector.shape_cast %146 : vector<8xf32> to vector<8x1xf32>
    %cst_67 = arith.constant 3.200000e+01 : f32
    %148 = vector.broadcast %cst_67 : f32 to vector<8x1xf32>
    %149 = arith.divf %147, %148 : vector<8x1xf32>
    %cst_68 = arith.constant 9.99999997E-7 : f32
    %150 = vector.broadcast %cst_68 : f32 to vector<8x1xf32>
    %151 = arith.addf %149, %150 : vector<8x1xf32>
    %152 = math.rsqrt %151 : vector<8x1xf32>
    %153 = vector.broadcast %152 : vector<8x1xf32> to vector<8x32xf32>
    %154 = arith.mulf %142, %153 : vector<8x32xf32>
    %155 = vector.broadcast %144 : vector<1x32xf32> to vector<8x32xf32>
    %156 = arith.mulf %154, %155 : vector<8x32xf32>
    %c1_69 = arith.constant 1 : index
    %c0_70 = arith.constant 0 : index
    %c0_71 = arith.constant 0 : index
    %157 = vector.load %arg7[%c1_69, %c0_70, %c0_71] : memref<2x32x64xf32, #tpu.memory_space<vmem>>, vector<1x32x64xf32>
    %158 = vector.shape_cast %157 : vector<1x32x64xf32> to vector<32x64xf32>
    %cst_72 = arith.constant dense<0.000000e+00> : vector<8x64xf32>
    %159 = tpu.matmul %156, %158, %cst_72 {dimension_numbers = #tpu.dot_dimension_numbers<[1], [0], [0], [1], [0, 0, 1, 1], [], []>} : vector<8x32xf32>, vector<32x64xf32>, vector<8x64xf32> -> vector<8x64xf32>
    %160 = arith.mulf %159, %9 : vector<8x64xf32>
    %cst_73 = arith.constant dense<0.000000e+00> : vector<8x64xf32>
    %161 = tpu.matmul %159, %11, %cst_73 {dimension_numbers = #tpu.dot_dimension_numbers<[1], [0], [0], [1], [0, 0, 1, 1], [], []>} : vector<8x64xf32>, vector<64x64xf32>, vector<8x64xf32> -> vector<8x64xf32>
    %162 = arith.mulf %161, %10 : vector<8x64xf32>
    %163 = arith.addf %160, %162 : vector<8x64xf32>
    %164 = vector.extract_strided_slice %163 {offsets = [0, 0], sizes = [8, 8], strides = [1, 1]} : vector<8x64xf32> to vector<8x8xf32>
    %165 = vector.extract_strided_slice %163 {offsets = [0, 32], sizes = [8, 8], strides = [1, 1]} : vector<8x64xf32> to vector<8x8xf32>
    %166 = vector.extract_strided_slice %163 {offsets = [0, 48], sizes = [8, 8], strides = [1, 1]} : vector<8x64xf32> to vector<8x8xf32>
    %cst_74 = arith.constant dense<0.000000e+00> : vector<8x8xf32>
    %167 = tpu.matmul %164, %165, %cst_74 {dimension_numbers = #tpu.dot_dimension_numbers<[1], [1], [0], [0], [0, 0, 1, 0], [], []>} : vector<8x8xf32>, vector<8x8xf32>, vector<8x8xf32> -> vector<8x8xf32>
    %cst_75 = arith.constant 0.353553385 : f32
    %168 = vector.broadcast %cst_75 : f32 to vector<8x8xf32>
    %169 = arith.mulf %167, %168 : vector<8x8xf32>
    %cst_76 = arith.constant -1.000000e+30 : f32
    %170 = vector.broadcast %cst_76 : f32 to vector<8x8xf32>
    %171 = arith.select %14, %169, %170 : vector<8x8xi1>, vector<8x8xf32>
    %cst_77 = arith.constant dense<0xFF800000> : vector<8xf32>
    %172 = vector.multi_reduction <maximumf>, %171, %cst_77 [1] : vector<8x8xf32> to vector<8xf32>
    %173 = vector.shape_cast %172 : vector<8xf32> to vector<8x1xf32>
    %174 = vector.broadcast %173 : vector<8x1xf32> to vector<8x8xf32>
    %175 = arith.subf %171, %174 : vector<8x8xf32>
    %176 = math.exp %175 : vector<8x8xf32>
    %cst_78 = arith.constant dense<0.000000e+00> : vector<8xf32>
    %177 = vector.multi_reduction <add>, %176, %cst_78 [1] : vector<8x8xf32> to vector<8xf32>
    %178 = vector.shape_cast %177 : vector<8xf32> to vector<8x1xf32>
    %cst_79 = arith.constant dense<0.000000e+00> : vector<8x8xf32>
    %179 = tpu.matmul %176, %166, %cst_79 {dimension_numbers = #tpu.dot_dimension_numbers<[1], [0], [0], [1], [0, 0, 1, 1], [], []>} : vector<8x8xf32>, vector<8x8xf32>, vector<8x8xf32> -> vector<8x8xf32>
    %180 = vector.broadcast %178 : vector<8x1xf32> to vector<8x8xf32>
    %181 = arith.divf %179, %180 : vector<8x8xf32>
    %182 = vector.extract_strided_slice %163 {offsets = [0, 8], sizes = [8, 8], strides = [1, 1]} : vector<8x64xf32> to vector<8x8xf32>
    %183 = vector.extract_strided_slice %163 {offsets = [0, 32], sizes = [8, 8], strides = [1, 1]} : vector<8x64xf32> to vector<8x8xf32>
    %184 = vector.extract_strided_slice %163 {offsets = [0, 48], sizes = [8, 8], strides = [1, 1]} : vector<8x64xf32> to vector<8x8xf32>
    %cst_80 = arith.constant dense<0.000000e+00> : vector<8x8xf32>
    %185 = tpu.matmul %182, %183, %cst_80 {dimension_numbers = #tpu.dot_dimension_numbers<[1], [1], [0], [0], [0, 0, 1, 0], [], []>} : vector<8x8xf32>, vector<8x8xf32>, vector<8x8xf32> -> vector<8x8xf32>
    %cst_81 = arith.constant 0.353553385 : f32
    %186 = vector.broadcast %cst_81 : f32 to vector<8x8xf32>
    %187 = arith.mulf %185, %186 : vector<8x8xf32>
    %cst_82 = arith.constant -1.000000e+30 : f32
    %188 = vector.broadcast %cst_82 : f32 to vector<8x8xf32>
    %189 = arith.select %14, %187, %188 : vector<8x8xi1>, vector<8x8xf32>
    %cst_83 = arith.constant dense<0xFF800000> : vector<8xf32>
    %190 = vector.multi_reduction <maximumf>, %189, %cst_83 [1] : vector<8x8xf32> to vector<8xf32>
    %191 = vector.shape_cast %190 : vector<8xf32> to vector<8x1xf32>
    %192 = vector.broadcast %191 : vector<8x1xf32> to vector<8x8xf32>
    %193 = arith.subf %189, %192 : vector<8x8xf32>
    %194 = math.exp %193 : vector<8x8xf32>
    %cst_84 = arith.constant dense<0.000000e+00> : vector<8xf32>
    %195 = vector.multi_reduction <add>, %194, %cst_84 [1] : vector<8x8xf32> to vector<8xf32>
    %196 = vector.shape_cast %195 : vector<8xf32> to vector<8x1xf32>
    %cst_85 = arith.constant dense<0.000000e+00> : vector<8x8xf32>
    %197 = tpu.matmul %194, %184, %cst_85 {dimension_numbers = #tpu.dot_dimension_numbers<[1], [0], [0], [1], [0, 0, 1, 1], [], []>} : vector<8x8xf32>, vector<8x8xf32>, vector<8x8xf32> -> vector<8x8xf32>
    %198 = vector.broadcast %196 : vector<8x1xf32> to vector<8x8xf32>
    %199 = arith.divf %197, %198 : vector<8x8xf32>
    %200 = vector.extract_strided_slice %163 {offsets = [0, 16], sizes = [8, 8], strides = [1, 1]} : vector<8x64xf32> to vector<8x8xf32>
    %201 = vector.extract_strided_slice %163 {offsets = [0, 40], sizes = [8, 8], strides = [1, 1]} : vector<8x64xf32> to vector<8x8xf32>
    %202 = vector.extract_strided_slice %163 {offsets = [0, 56], sizes = [8, 8], strides = [1, 1]} : vector<8x64xf32> to vector<8x8xf32>
    %cst_86 = arith.constant dense<0.000000e+00> : vector<8x8xf32>
    %203 = tpu.matmul %200, %201, %cst_86 {dimension_numbers = #tpu.dot_dimension_numbers<[1], [1], [0], [0], [0, 0, 1, 0], [], []>} : vector<8x8xf32>, vector<8x8xf32>, vector<8x8xf32> -> vector<8x8xf32>
    %cst_87 = arith.constant 0.353553385 : f32
    %204 = vector.broadcast %cst_87 : f32 to vector<8x8xf32>
    %205 = arith.mulf %203, %204 : vector<8x8xf32>
    %cst_88 = arith.constant -1.000000e+30 : f32
    %206 = vector.broadcast %cst_88 : f32 to vector<8x8xf32>
    %207 = arith.select %14, %205, %206 : vector<8x8xi1>, vector<8x8xf32>
    %cst_89 = arith.constant dense<0xFF800000> : vector<8xf32>
    %208 = vector.multi_reduction <maximumf>, %207, %cst_89 [1] : vector<8x8xf32> to vector<8xf32>
    %209 = vector.shape_cast %208 : vector<8xf32> to vector<8x1xf32>
    %210 = vector.broadcast %209 : vector<8x1xf32> to vector<8x8xf32>
    %211 = arith.subf %207, %210 : vector<8x8xf32>
    %212 = math.exp %211 : vector<8x8xf32>
    %cst_90 = arith.constant dense<0.000000e+00> : vector<8xf32>
    %213 = vector.multi_reduction <add>, %212, %cst_90 [1] : vector<8x8xf32> to vector<8xf32>
    %214 = vector.shape_cast %213 : vector<8xf32> to vector<8x1xf32>
    %cst_91 = arith.constant dense<0.000000e+00> : vector<8x8xf32>
    %215 = tpu.matmul %212, %202, %cst_91 {dimension_numbers = #tpu.dot_dimension_numbers<[1], [0], [0], [1], [0, 0, 1, 1], [], []>} : vector<8x8xf32>, vector<8x8xf32>, vector<8x8xf32> -> vector<8x8xf32>
    %216 = vector.broadcast %214 : vector<8x1xf32> to vector<8x8xf32>
    %217 = arith.divf %215, %216 : vector<8x8xf32>
    %218 = vector.extract_strided_slice %163 {offsets = [0, 24], sizes = [8, 8], strides = [1, 1]} : vector<8x64xf32> to vector<8x8xf32>
    %219 = vector.extract_strided_slice %163 {offsets = [0, 40], sizes = [8, 8], strides = [1, 1]} : vector<8x64xf32> to vector<8x8xf32>
    %220 = vector.extract_strided_slice %163 {offsets = [0, 56], sizes = [8, 8], strides = [1, 1]} : vector<8x64xf32> to vector<8x8xf32>
    %cst_92 = arith.constant dense<0.000000e+00> : vector<8x8xf32>
    %221 = tpu.matmul %218, %219, %cst_92 {dimension_numbers = #tpu.dot_dimension_numbers<[1], [1], [0], [0], [0, 0, 1, 0], [], []>} : vector<8x8xf32>, vector<8x8xf32>, vector<8x8xf32> -> vector<8x8xf32>
    %cst_93 = arith.constant 0.353553385 : f32
    %222 = vector.broadcast %cst_93 : f32 to vector<8x8xf32>
    %223 = arith.mulf %221, %222 : vector<8x8xf32>
    %cst_94 = arith.constant -1.000000e+30 : f32
    %224 = vector.broadcast %cst_94 : f32 to vector<8x8xf32>
    %225 = arith.select %14, %223, %224 : vector<8x8xi1>, vector<8x8xf32>
    %cst_95 = arith.constant dense<0xFF800000> : vector<8xf32>
    %226 = vector.multi_reduction <maximumf>, %225, %cst_95 [1] : vector<8x8xf32> to vector<8xf32>
    %227 = vector.shape_cast %226 : vector<8xf32> to vector<8x1xf32>
    %228 = vector.broadcast %227 : vector<8x1xf32> to vector<8x8xf32>
    %229 = arith.subf %225, %228 : vector<8x8xf32>
    %230 = math.exp %229 : vector<8x8xf32>
    %cst_96 = arith.constant dense<0.000000e+00> : vector<8xf32>
    %231 = vector.multi_reduction <add>, %230, %cst_96 [1] : vector<8x8xf32> to vector<8xf32>
    %232 = vector.shape_cast %231 : vector<8xf32> to vector<8x1xf32>
    %cst_97 = arith.constant dense<0.000000e+00> : vector<8x8xf32>
    %233 = tpu.matmul %230, %220, %cst_97 {dimension_numbers = #tpu.dot_dimension_numbers<[1], [0], [0], [1], [0, 0, 1, 1], [], []>} : vector<8x8xf32>, vector<8x8xf32>, vector<8x8xf32> -> vector<8x8xf32>
    %234 = vector.broadcast %232 : vector<8x1xf32> to vector<8x8xf32>
    %235 = arith.divf %233, %234 : vector<8x8xf32>
    %236 = tpu.concatenate %181, %199, %217, %235 in 1 : vector<8x8xf32>, vector<8x8xf32>, vector<8x8xf32>, vector<8x8xf32> -> vector<8x32xf32>
    %c1_98 = arith.constant 1 : index
    %c0_99 = arith.constant 0 : index
    %c0_100 = arith.constant 0 : index
    %237 = vector.load %arg8[%c1_98, %c0_99, %c0_100] : memref<2x32x32xf32, #tpu.memory_space<vmem>>, vector<1x32x32xf32>
    %238 = vector.shape_cast %237 : vector<1x32x32xf32> to vector<32x32xf32>
    %cst_101 = arith.constant dense<0.000000e+00> : vector<8x32xf32>
    %239 = tpu.matmul %236, %238, %cst_101 {dimension_numbers = #tpu.dot_dimension_numbers<[1], [0], [0], [1], [0, 0, 1, 1], [], []>} : vector<8x32xf32>, vector<32x32xf32>, vector<8x32xf32> -> vector<8x32xf32>
    %240 = arith.addf %142, %239 : vector<8x32xf32>
    %c1_102 = arith.constant 1 : index
    %c0_103 = arith.constant 0 : index
    %c0_104 = arith.constant 0 : index
    %241 = vector.load %arg9[%c1_102, %c0_103, %c0_104] : memref<2x1x32xf32, #tpu.memory_space<vmem>>, vector<1x1x32xf32>
    %242 = vector.shape_cast %241 : vector<1x1x32xf32> to vector<1x32xf32>
    %243 = arith.mulf %240, %240 : vector<8x32xf32>
    %cst_105 = arith.constant dense<0.000000e+00> : vector<8xf32>
    %244 = vector.multi_reduction <add>, %243, %cst_105 [1] : vector<8x32xf32> to vector<8xf32>
    %245 = vector.shape_cast %244 : vector<8xf32> to vector<8x1xf32>
    %cst_106 = arith.constant 3.200000e+01 : f32
    %246 = vector.broadcast %cst_106 : f32 to vector<8x1xf32>
    %247 = arith.divf %245, %246 : vector<8x1xf32>
    %cst_107 = arith.constant 9.99999997E-7 : f32
    %248 = vector.broadcast %cst_107 : f32 to vector<8x1xf32>
    %249 = arith.addf %247, %248 : vector<8x1xf32>
    %250 = math.rsqrt %249 : vector<8x1xf32>
    %251 = vector.broadcast %250 : vector<8x1xf32> to vector<8x32xf32>
    %252 = arith.mulf %240, %251 : vector<8x32xf32>
    %253 = vector.broadcast %242 : vector<1x32xf32> to vector<8x32xf32>
    %254 = arith.mulf %252, %253 : vector<8x32xf32>
    %c1_108 = arith.constant 1 : index
    %c0_109 = arith.constant 0 : index
    %c0_110 = arith.constant 0 : index
    %255 = vector.load %arg10[%c1_108, %c0_109, %c0_110] : memref<2x32x128xf32, #tpu.memory_space<vmem>>, vector<1x32x128xf32>
    %256 = vector.shape_cast %255 : vector<1x32x128xf32> to vector<32x128xf32>
    %cst_111 = arith.constant dense<0.000000e+00> : vector<8x128xf32>
    %257 = tpu.matmul %254, %256, %cst_111 {dimension_numbers = #tpu.dot_dimension_numbers<[1], [0], [0], [1], [0, 0, 1, 1], [], []>} : vector<8x32xf32>, vector<32x128xf32>, vector<8x128xf32> -> vector<8x128xf32>
    %258 = vector.extract_strided_slice %257 {offsets = [0, 0], sizes = [8, 64], strides = [1, 1]} : vector<8x128xf32> to vector<8x64xf32>
    %259 = vector.extract_strided_slice %257 {offsets = [0, 64], sizes = [8, 64], strides = [1, 1]} : vector<8x128xf32> to vector<8x64xf32>
    %260 = arith.negf %258 : vector<8x64xf32>
    %261 = math.exp %260 : vector<8x64xf32>
    %cst_112 = arith.constant 1.000000e+00 : f32
    %262 = vector.broadcast %cst_112 : f32 to vector<8x64xf32>
    %263 = arith.addf %262, %261 : vector<8x64xf32>
    %264 = arith.divf %262, %263 : vector<8x64xf32>
    %265 = arith.mulf %258, %264 : vector<8x64xf32>
    %266 = arith.mulf %265, %259 : vector<8x64xf32>
    %c1_113 = arith.constant 1 : index
    %c0_114 = arith.constant 0 : index
    %c0_115 = arith.constant 0 : index
    %267 = vector.load %arg11[%c1_113, %c0_114, %c0_115] : memref<2x64x32xf32, #tpu.memory_space<vmem>>, vector<1x64x32xf32>
    %268 = vector.shape_cast %267 : vector<1x64x32xf32> to vector<64x32xf32>
    %cst_116 = arith.constant dense<0.000000e+00> : vector<8x32xf32>
    %269 = tpu.matmul %266, %268, %cst_116 {dimension_numbers = #tpu.dot_dimension_numbers<[1], [0], [0], [1], [0, 0, 1, 1], [], []>} : vector<8x64xf32>, vector<64x32xf32>, vector<8x32xf32> -> vector<8x32xf32>
    %270 = arith.addf %240, %269 : vector<8x32xf32>
    %c0_117 = arith.constant 0 : index
    %c0_118 = arith.constant 0 : index
    %271 = vector.load %arg12[%c0_117, %c0_118] : memref<1x32xf32, #tpu.memory_space<vmem>>, vector<1x32xf32>
    %272 = arith.mulf %270, %270 : vector<8x32xf32>
    %cst_119 = arith.constant dense<0.000000e+00> : vector<8xf32>
    %273 = vector.multi_reduction <add>, %272, %cst_119 [1] : vector<8x32xf32> to vector<8xf32>
    %274 = vector.shape_cast %273 : vector<8xf32> to vector<8x1xf32>
    %cst_120 = arith.constant 3.200000e+01 : f32
    %275 = vector.broadcast %cst_120 : f32 to vector<8x1xf32>
    %276 = arith.divf %274, %275 : vector<8x1xf32>
    %cst_121 = arith.constant 9.99999997E-7 : f32
    %277 = vector.broadcast %cst_121 : f32 to vector<8x1xf32>
    %278 = arith.addf %276, %277 : vector<8x1xf32>
    %279 = math.rsqrt %278 : vector<8x1xf32>
    %280 = vector.broadcast %279 : vector<8x1xf32> to vector<8x32xf32>
    %281 = arith.mulf %270, %280 : vector<8x32xf32>
    %282 = vector.broadcast %271 : vector<1x32xf32> to vector<8x32xf32>
    %283 = arith.mulf %281, %282 : vector<8x32xf32>
    %c0_122 = arith.constant 0 : index
    %c0_123 = arith.constant 0 : index
    %284 = vector.load %arg13[%c0_122, %c0_123] : memref<32x64xf32, #tpu.memory_space<vmem>>, vector<32x64xf32>
    %cst_124 = arith.constant dense<0.000000e+00> : vector<8x64xf32>
    %285 = tpu.matmul %283, %284, %cst_124 {dimension_numbers = #tpu.dot_dimension_numbers<[1], [0], [0], [1], [0, 0, 1, 1], [], []>} : vector<8x32xf32>, vector<32x64xf32>, vector<8x64xf32> -> vector<8x64xf32>
    %c0_125 = arith.constant 0 : index
    %c0_126 = arith.constant 0 : index
    %c0_127 = arith.constant 0 : index
    %286 = vector.load %arg14[%c0_125, %c0_126, %c0_127] : memref<1x8x64xf32, #tpu.memory_space<vmem>>, vector<1x8x64xf32>
    %287 = vector.shape_cast %286 : vector<1x8x64xf32> to vector<8x64xf32>
    %288 = vector.shape_cast %285 : vector<8x64xf32> to vector<1x8x64xf32>
    tpu.vector_store %arg14[%c0_125, %c0_126, %c0_127], %288 {strides = array<i32>} : memref<1x8x64xf32, #tpu.memory_space<vmem>>, vector<1x8x64xf32>,
    return
  }
  func.func @transform_0(%arg0: i32) -> (i32, i32, i32) {
    %c0_i32 = arith.constant 0 : i32
    %c0_i32_0 = arith.constant 0 : i32
    %c0_i32_1 = arith.constant 0 : i32
    return %arg0, %c0_i32, %c0_i32_0 : i32, i32, i32
  }
  func.func @transform_1(%arg0: i32) -> (i32, i32) {
    %c0_i32 = arith.constant 0 : i32
    %c0_i32_0 = arith.constant 0 : i32
    %c0_i32_1 = arith.constant 0 : i32
    return %c0_i32, %c0_i32_0 : i32, i32
  }
  func.func @transform_2(%arg0: i32) -> (i32, i32) {
    %c0_i32 = arith.constant 0 : i32
    %c0_i32_0 = arith.constant 0 : i32
    %c0_i32_1 = arith.constant 0 : i32
    return %c0_i32, %c0_i32_0 : i32, i32
  }
  func.func @transform_3(%arg0: i32) -> (i32, i32) {
    %c0_i32 = arith.constant 0 : i32
    %c0_i32_0 = arith.constant 0 : i32
    %c0_i32_1 = arith.constant 0 : i32
    return %c0_i32, %c0_i32_0 : i32, i32
  }
  func.func @transform_4(%arg0: i32) -> (i32, i32) {
    %c0_i32 = arith.constant 0 : i32
    %c0_i32_0 = arith.constant 0 : i32
    %c0_i32_1 = arith.constant 0 : i32
    return %c0_i32, %c0_i32_0 : i32, i32
  }
  func.func @transform_5(%arg0: i32) -> (i32, i32, i32) {
    %c0_i32 = arith.constant 0 : i32
    %c0_i32_0 = arith.constant 0 : i32
    %c0_i32_1 = arith.constant 0 : i32
    %c0_i32_2 = arith.constant 0 : i32
    return %c0_i32, %c0_i32_0, %c0_i32_1 : i32, i32, i32
  }
  func.func @transform_6(%arg0: i32) -> (i32, i32, i32) {
    %c0_i32 = arith.constant 0 : i32
    %c0_i32_0 = arith.constant 0 : i32
    %c0_i32_1 = arith.constant 0 : i32
    %c0_i32_2 = arith.constant 0 : i32
    return %c0_i32, %c0_i32_0, %c0_i32_1 : i32, i32, i32
  }
  func.func @transform_7(%arg0: i32) -> (i32, i32, i32) {
    %c0_i32 = arith.constant 0 : i32
    %c0_i32_0 = arith.constant 0 : i32
    %c0_i32_1 = arith.constant 0 : i32
    %c0_i32_2 = arith.constant 0 : i32
    return %c0_i32, %c0_i32_0, %c0_i32_1 : i32, i32, i32
  }
  func.func @transform_8(%arg0: i32) -> (i32, i32, i32) {
    %c0_i32 = arith.constant 0 : i32
    %c0_i32_0 = arith.constant 0 : i32
    %c0_i32_1 = arith.constant 0 : i32
    %c0_i32_2 = arith.constant 0 : i32
    return %c0_i32, %c0_i32_0, %c0_i32_1 : i32, i32, i32
  }
  func.func @transform_9(%arg0: i32) -> (i32, i32, i32) {
    %c0_i32 = arith.constant 0 : i32
    %c0_i32_0 = arith.constant 0 : i32
    %c0_i32_1 = arith.constant 0 : i32
    %c0_i32_2 = arith.constant 0 : i32
    return %c0_i32, %c0_i32_0, %c0_i32_1 : i32, i32, i32
  }
  func.func @transform_10(%arg0: i32) -> (i32, i32, i32) {
    %c0_i32 = arith.constant 0 : i32
    %c0_i32_0 = arith.constant 0 : i32
    %c0_i32_1 = arith.constant 0 : i32
    %c0_i32_2 = arith.constant 0 : i32
    return %c0_i32, %c0_i32_0, %c0_i32_1 : i32, i32, i32
  }
  func.func @transform_11(%arg0: i32) -> (i32, i32) {
    %c0_i32 = arith.constant 0 : i32
    %c0_i32_0 = arith.constant 0 : i32
    %c0_i32_1 = arith.constant 0 : i32
    return %c0_i32, %c0_i32_0 : i32, i32
  }
  func.func @transform_12(%arg0: i32) -> (i32, i32) {
    %c0_i32 = arith.constant 0 : i32
    %c0_i32_0 = arith.constant 0 : i32
    %c0_i32_1 = arith.constant 0 : i32
    return %c0_i32, %c0_i32_0 : i32, i32
  }
  func.func @transform_13(%arg0: i32) -> (i32, i32, i32) {
    %c0_i32 = arith.constant 0 : i32
    %c0_i32_0 = arith.constant 0 : i32
    %c0_i32_1 = arith.constant 0 : i32
    return %arg0, %c0_i32, %c0_i32_0 : i32, i32, i32
  }
}

</mosaic_0001>

<llo_original>
// kernel: decoder_forward_pallas.1
$region0: #{decoder_forward_pallas.1}
  #allocation0 [shape = 'u32[]', space=smem, size = 0x4, offset = 0x4, fixed_abs, tag = 'smem constant byte address 0x4 - core index']
  #allocation1 [shape = 'u32[72,128]{1,0:T(1,128)}', space=vmem, size = 0x9000, scoped, tag = 'internal scratch']
  %s0 = inlined_call_operand.vmem [shape: s32[2,8,1], index: 0, kind: input, shape index: {}]
  %s1 = inlined_call_operand.vmem [shape: f32[8,64], index: 1, kind: input, shape index: {}]
  %s2 = inlined_call_operand.vmem [shape: f32[8,64], index: 2, kind: input, shape index: {}]
  %s3 = inlined_call_operand.vmem [shape: f32[64,64], index: 3, kind: input, shape index: {}]
  %s4 = inlined_call_operand.vmem [shape: f32[64,32], index: 4, kind: input, shape index: {}]
  %s5 = inlined_call_operand.vmem [shape: f32[2,1,32], index: 5, kind: input, shape index: {}]
  %s6 = inlined_call_operand.vmem [shape: f32[2,32,64], index: 6, kind: input, shape index: {}]
  %s7 = inlined_call_operand.vmem [shape: f32[2,32,32], index: 7, kind: input, shape index: {}]
  %s8 = inlined_call_operand.vmem [shape: f32[2,1,32], index: 8, kind: input, shape index: {}]
  %s9 = inlined_call_operand.hbm [shape: f32[2,32,128], index: 9, kind: input, shape index: {}]
  %s10 = inlined_call_operand.vmem [shape: f32[2,64,32], index: 10, kind: input, shape index: {}]
  %s11 = inlined_call_operand.vmem [shape: f32[1,32], index: 11, kind: input, shape index: {}]
  %s12 = inlined_call_operand.vmem [shape: f32[32,64], index: 12, kind: input, shape index: {}]
  %s13 = inlined_call_operand.hbm [shape: f32[2,8,64], index: 13, kind: output, shape index: {}]
  %s14 = sld [smem:[#allocation0]]
  $region89: #{decoder_forward_pallas.1} parent=0
    _
  %s16 = ssub.s32 1, %s14
  %s17 = scalar_select 0, %s16, %s14
  $region1: #{decoder_forward_pallas.1} parent=0
    #allocation2 [shape = 'u8[32768]{0}', space=vmem, size = 0x8000, scoped, tag = 'input window, operand 9, single buffered']
    #allocation3 [shape = 's32[2]{0}', space=sflag, size = 0x8, scoped, tag = 'scoped memory for decoder_forward_pallas.1']
    #allocation4 [shape = 's32[2]{0}', space=sflag, size = 0x8, scoped, tag = 'scoped memory for decoder_forward_pallas.1']
    #allocation5 [shape = 'u8[8192]{0}', space=vmem, size = 0x2000, scoped, tag = 'output window, operand 0']
    %18 = vsyncpa [#allocation3], 0
    %19 = vsyncpa [#allocation4], 0
    %s20 = scalar_lea.sflag [#allocation4], 1
    %21 = vsyncpa %s20, 0
    loop: start=0, step=1, limit=4
    $region2: #{decoder_forward_pallas.1} parent=1 // loop_pre_header
      _
    $region3: #{decoder_forward_pallas.1} parent=1 // loop_header
      %s23 = sphi 0, %s27
      %p24 = scmp.ge.s32.totalorder %s23, 4
      %s33 = sphi 0, %s35
      %s36 = sphi 0, %s33
      %s37 = sphi 0, %s36
      %s53 = sphi 0, %s37
      %s57 = sphi 0, %s57
      %s59 = sphi 0, %s57
      %s60 = sphi 0, %s59
      %s74 = sphi 0, %s60
      %s78 = sphi 0, %s78
      %s80 = sphi 0, %s78
      %s81 = sphi 0, %s80
      %s95 = sphi 0, %s81
      %s99 = sphi 0, %s99
      %s101 = sphi 0, %s99
      %s102 = sphi 0, %s101
      %s116 = sphi 0, %s102
      %s120 = sphi 0, %s120
      %s122 = sphi 0, %s120
      %s123 = sphi 0, %s122
      %s137 = sphi 0, %s123
      %s141 = sphi 0, %s141
      %s143 = sphi 0, %s141
      %s144 = sphi 0, %s143
      %s158 = sphi 0, %s144
      %s162 = sphi 0, %s162
      %s164 = sphi 0, %s162
      %s165 = sphi 0, %s164
      %s179 = sphi 0, %s165
      %s183 = sphi 0, %s183
      %s185 = sphi 0, %s183
      %s186 = sphi 0, %s185
      %s200 = sphi 0, %s186
      %s204 = sphi 0, %s204
      %s206 = sphi 0, %s204
      %s207 = sphi 0, %s206
      %s221 = sphi 0, %s207
      %s225 = sphi 0, %s225
      %s227 = sphi 0, %s225
      %s228 = sphi 0, %s227
      %s242 = sphi 0, %s228
      %s246 = sphi 0, %s246
      %s248 = sphi 0, %s246
      %s249 = sphi 0, %s248
      %s263 = sphi 0, %s249
      %s267 = sphi 0, %s267
      %s269 = sphi 0, %s267
      %s270 = sphi 0, %s269
      %s284 = sphi 0, %s270
      %s288 = sphi 0, %s288
      %s290 = sphi 0, %s288
      %s291 = sphi 0, %s290
      %s305 = sphi 0, %s291
      %s311 = sphi 0, %s313
      %s314 = sphi 0, %s311
      %s315 = sphi 0, %s314
      %s331 = sphi 0, %s315
    $region4: #{decoder_forward_pallas.1} parent=1 // loop_header_branch
      %26 = sbr.rel (%p24) target = $region8
    $region5: #{decoder_forward_pallas.1} parent=1 // loop_body
      %s28 = ssub.s32 %s23, 1
      %s29 = ssub.s32 %s23, 2
      %s30 = sadd.s32 %s23, 1
      %s31 = ssub.s32 %s23, %s30
      %p32 = scmp.eq.s32.totalorder %s31, 0
      %s34 = sadd.s32 %s33, 1
      %s35 = scalar_select %p32, %s33, %s34
      %p38 = pneg %p32
      %p39 = scmp.eq.s32.totalorder %s23, 1
      %p40 = por %p38, %p39
      %p41 = scmp.ne.s32.totalorder %s33, %s36
      %p42 = scmp.eq.s32.totalorder %s23, 0
      %p43 = por %p41, %p42
      %p44 = scmp.ne.s32.totalorder %s33, %s36
      %p45 = scmp.eq.s32.totalorder %s28, 1
      %p46 = por %p44, %p45
      %p47 = scmp.ne.s32.totalorder %s36, %s37
      %p48 = scmp.eq.s32.totalorder %s28, 0
      %p49 = por %p47, %p48
      %p50 = scmp.ne.s32.totalorder %s36, %s37
      %p51 = scmp.eq.s32.totalorder %s29, 1
      %p52 = por %p50, %p51
      %p54 = scmp.ne.s32.totalorder %s37, %s53
      %p55 = scmp.eq.s32.totalorder %s29, 0
      %p56 = por %p54, %p55
      %s58 = sadd.s32 %s57, 1
      %p61 = scmp.eq.s32.totalorder %s23, 1
      %p62 = scmp.ne.s32.totalorder %s57, %s59
      %p63 = scmp.eq.s32.totalorder %s23, 0
      %p64 = por %p62, %p63
      %p65 = scmp.ne.s32.totalorder %s57, %s59
      %p66 = scmp.eq.s32.totalorder %s28, 1
      %p67 = por %p65, %p66
      %p68 = scmp.ne.s32.totalorder %s59, %s60
      %p69 = scmp.eq.s32.totalorder %s28, 0
      %p70 = por %p68, %p69
      %p71 = scmp.ne.s32.totalorder %s59, %s60
      %p72 = scmp.eq.s32.totalorder %s29, 1
      %p73 = por %p71, %p72
      %p75 = scmp.ne.s32.totalorder %s60, %s74
      %p76 = scmp.eq.s32.totalorder %s29, 0
      %p77 = por %p75, %p76
      %s79 = sadd.s32 %s78, 1
      %p82 = scmp.eq.s32.totalorder %s23, 1
      %p83 = scmp.ne.s32.totalorder %s78, %s80
      %p84 = scmp.eq.s32.totalorder %s23, 0
      %p85 = por %p83, %p84
      %p86 = scmp.ne.s32.totalorder %s78, %s80
      %p87 = scmp.eq.s32.totalorder %s28, 1
      %p88 = por %p86, %p87
      %p89 = scmp.ne.s32.totalorder %s80, %s81
      %p90 = scmp.eq.s32.totalorder %s28, 0
      %p91 = por %p89, %p90
      %p92 = scmp.ne.s32.totalorder %s80, %s81
      %p93 = scmp.eq.s32.totalorder %s29, 1
      %p94 = por %p92, %p93
      %p96 = scmp.ne.s32.totalorder %s81, %s95
      %p97 = scmp.eq.s32.totalorder %s29, 0
      %p98 = por %p96, %p97
      %s100 = sadd.s32 %s99, 1
      %p103 = scmp.eq.s32.totalorder %s23, 1
      %p104 = scmp.ne.s32.totalorder %s99, %s101
      %p105 = scmp.eq.s32.totalorder %s23, 0
      %p106 = por %p104, %p105
      %p107 = scmp.ne.s32.totalorder %s99, %s101
      %p108 = scmp.eq.s32.totalorder %s28, 1
      %p109 = por %p107, %p108
      %p110 = scmp.ne.s32.totalorder %s101, %s102
      %p111 = scmp.eq.s32.totalorder %s28, 0
      %p112 = por %p110, %p111
      %p113 = scmp.ne.s32.totalorder %s101, %s102
      %p114 = scmp.eq.s32.totalorder %s29, 1
      %p115 = por %p113, %p114
      %p117 = scmp.ne.s32.totalorder %s102, %s116
      %p118 = scmp.eq.s32.totalorder %s29, 0
      %p119 = por %p117, %p118
      %s121 = sadd.s32 %s120, 1
      %p124 = scmp.eq.s32.totalorder %s23, 1
      %p125 = scmp.ne.s32.totalorder %s120, %s122
      %p126 = scmp.eq.s32.totalorder %s23, 0
      %p127 = por %p125, %p126
      %p128 = scmp.ne.s32.totalorder %s120, %s122
      %p129 = scmp.eq.s32.totalorder %s28, 1
      %p130 = por %p128, %p129
      %p131 = scmp.ne.s32.totalorder %s122, %s123
      %p132 = scmp.eq.s32.totalorder %s28, 0
      %p133 = por %p131, %p132
      %p134 = scmp.ne.s32.totalorder %s122, %s123
      %p135 = scmp.eq.s32.totalorder %s29, 1
      %p136 = por %p134, %p135
      %p138 = scmp.ne.s32.totalorder %s123, %s137
      %p139 = scmp.eq.s32.totalorder %s29, 0
      %p140 = por %p138, %p139
      %s142 = sadd.s32 %s141, 1
      %p145 = scmp.eq.s32.totalorder %s23, 1
      %p146 = scmp.ne.s32.totalorder %s141, %s143
      %p147 = scmp.eq.s32.totalorder %s23, 0
      %p148 = por %p146, %p147
      %p149 = scmp.ne.s32.totalorder %s141, %s143
      %p150 = scmp.eq.s32.totalorder %s28, 1
      %p151 = por %p149, %p150
      %p152 = scmp.ne.s32.totalorder %s143, %s144
      %p153 = scmp.eq.s32.totalorder %s28, 0
      %p154 = por %p152, %p153
      %p155 = scmp.ne.s32.totalorder %s143, %s144
      %p156 = scmp.eq.s32.totalorder %s29, 1
      %p157 = por %p155, %p156
      %p159 = scmp.ne.s32.totalorder %s144, %s158
      %p160 = scmp.eq.s32.totalorder %s29, 0
      %p161 = por %p159, %p160
      %s163 = sadd.s32 %s162, 1
      %p166 = scmp.eq.s32.totalorder %s23, 1
      %p167 = scmp.ne.s32.totalorder %s162, %s164
      %p168 = scmp.eq.s32.totalorder %s23, 0
      %p169 = por %p167, %p168
      %p170 = scmp.ne.s32.totalorder %s162, %s164
      %p171 = scmp.eq.s32.totalorder %s28, 1
      %p172 = por %p170, %p171
      %p173 = scmp.ne.s32.totalorder %s164, %s165
      %p174 = scmp.eq.s32.totalorder %s28, 0
      %p175 = por %p173, %p174
      %p176 = scmp.ne.s32.totalorder %s164, %s165
      %p177 = scmp.eq.s32.totalorder %s29, 1
      %p178 = por %p176, %p177
      %p180 = scmp.ne.s32.totalorder %s165, %s179
      %p181 = scmp.eq.s32.totalorder %s29, 0
      %p182 = por %p180, %p181
      %s184 = sadd.s32 %s183, 1
      %p187 = scmp.eq.s32.totalorder %s23, 1
      %p188 = scmp.ne.s32.totalorder %s183, %s185
      %p189 = scmp.eq.s32.totalorder %s23, 0
      %p190 = por %p188, %p189
      %p191 = scmp.ne.s32.totalorder %s183, %s185
      %p192 = scmp.eq.s32.totalorder %s28, 1
      %p193 = por %p191, %p192
      %p194 = scmp.ne.s32.totalorder %s185, %s186
      %p195 = scmp.eq.s32.totalorder %s28, 0
      %p196 = por %p194, %p195
      %p197 = scmp.ne.s32.totalorder %s185, %s186
      %p198 = scmp.eq.s32.totalorder %s29, 1
      %p199 = por %p197, %p198
      %p201 = scmp.ne.s32.totalorder %s186, %s200
      %p202 = scmp.eq.s32.totalorder %s29, 0
      %p203 = por %p201, %p202
      %s205 = sadd.s32 %s204, 1
      %p208 = scmp.eq.s32.totalorder %s23, 1
      %p209 = scmp.ne.s32.totalorder %s204, %s206
      %p210 = scmp.eq.s32.totalorder %s23, 0
      %p211 = por %p209, %p210
      %p212 = scmp.ne.s32.totalorder %s204, %s206
      %p213 = scmp.eq.s32.totalorder %s28, 1
      %p214 = por %p212, %p213
      %p215 = scmp.ne.s32.totalorder %s206, %s207
      %p216 = scmp.eq.s32.totalorder %s28, 0
      %p217 = por %p215, %p216
      %p218 = scmp.ne.s32.totalorder %s206, %s207
      %p219 = scmp.eq.s32.totalorder %s29, 1
      %p220 = por %p218, %p219
      %p222 = scmp.ne.s32.totalorder %s207, %s221
      %p223 = scmp.eq.s32.totalorder %s29, 0
      %p224 = por %p222, %p223
      %s226 = sadd.s32 %s225, 1
      %p229 = scmp.eq.s32.totalorder %s23, 1
      %p230 = scmp.ne.s32.totalorder %s225, %s227
      %p231 = scmp.eq.s32.totalorder %s23, 0
      %p232 = por %p230, %p231
      %p233 = scmp.ne.s32.totalorder %s225, %s227
      %p234 = scmp.eq.s32.totalorder %s28, 1
      %p235 = por %p233, %p234
      %p236 = scmp.ne.s32.totalorder %s227, %s228
      %p237 = scmp.eq.s32.totalorder %s28, 0
      %p238 = por %p236, %p237
      %p239 = scmp.ne.s32.totalorder %s227, %s228
      %p240 = scmp.eq.s32.totalorder %s29, 1
      %p241 = por %p239, %p240
      %p243 = scmp.ne.s32.totalorder %s228, %s242
      %p244 = scmp.eq.s32.totalorder %s29, 0
      %p245 = por %p243, %p244
      %s247 = sadd.s32 %s246, 1
      %p250 = scmp.eq.s32.totalorder %s23, 1
      %p251 = scmp.ne.s32.totalorder %s246, %s248
      %p252 = scmp.eq.s32.totalorder %s23, 0
      %p253 = por %p251, %p252
      %p254 = scmp.ne.s32.totalorder %s246, %s248
      %p255 = scmp.eq.s32.totalorder %s28, 1
      %p256 = por %p254, %p255
      %p257 = scmp.ne.s32.totalorder %s248, %s249
      %p258 = scmp.eq.s32.totalorder %s28, 0
      %p259 = por %p257, %p258
      %p260 = scmp.ne.s32.totalorder %s248, %s249
      %p261 = scmp.eq.s32.totalorder %s29, 1
      %p262 = por %p260, %p261
      %p264 = scmp.ne.s32.totalorder %s249, %s263
      %p265 = scmp.eq.s32.totalorder %s29, 0
      %p266 = por %p264, %p265
      %s268 = sadd.s32 %s267, 1
      %p271 = scmp.eq.s32.totalorder %s23, 1
      %p272 = scmp.ne.s32.totalorder %s267, %s269
      %p273 = scmp.eq.s32.totalorder %s23, 0
      %p274 = por %p272, %p273
      %p275 = scmp.ne.s32.totalorder %s267, %s269
      %p276 = scmp.eq.s32.totalorder %s28, 1
      %p277 = por %p275, %p276
      %p278 = scmp.ne.s32.totalorder %s269, %s270
      %p279 = scmp.eq.s32.totalorder %s28, 0
      %p280 = por %p278, %p279
      %p281 = scmp.ne.s32.totalorder %s269, %s270
      %p282 = scmp.eq.s32.totalorder %s29, 1
      %p283 = por %p281, %p282
      %p285 = scmp.ne.s32.totalorder %s270, %s284
      %p286 = scmp.eq.s32.totalorder %s29, 0
      %p287 = por %p285, %p286
      %s289 = sadd.s32 %s288, 1
      %p292 = scmp.eq.s32.totalorder %s23, 1
      %p293 = scmp.ne.s32.totalorder %s288, %s290
      %p294 = scmp.eq.s32.totalorder %s23, 0
      %p295 = por %p293, %p294
      %p296 = scmp.ne.s32.totalorder %s288, %s290
      %p297 = scmp.eq.s32.totalorder %s28, 1
      %p298 = por %p296, %p297
      %p299 = scmp.ne.s32.totalorder %s290, %s291
      %p300 = scmp.eq.s32.totalorder %s28, 0
      %p301 = por %p299, %p300
      %p302 = scmp.ne.s32.totalorder %s290, %s291
      %p303 = scmp.eq.s32.totalorder %s29, 1
      %p304 = por %p302, %p303
      %p306 = scmp.ne.s32.totalorder %s291, %s305
      %p307 = scmp.eq.s32.totalorder %s29, 0
      %p308 = por %p306, %p307
      %s309 = ssub.s32 %s23, %s30
      %p310 = scmp.eq.s32.totalorder %s309, 0
      %s312 = sadd.s32 %s311, 1
      %s313 = scalar_select %p310, %s311, %s312
      %p316 = pneg %p310
      %p317 = scmp.eq.s32.totalorder %s23, 1
      %p318 = por %p316, %p317
      %p319 = scmp.ne.s32.totalorder %s311, %s314
      %p320 = scmp.eq.s32.totalorder %s23, 0
      %p321 = por %p319, %p320
      %p322 = scmp.ne.s32.totalorder %s311, %s314
      %p323 = scmp.eq.s32.totalorder %s28, 1
      %p324 = por %p322, %p323
      %p325 = scmp.ne.s32.totalorder %s314, %s315
      %p326 = scmp.eq.s32.totalorder %s28, 0
      %p327 = por %p325, %p326
      %p328 = scmp.ne.s32.totalorder %s314, %s315
      %p329 = scmp.eq.s32.totalorder %s29, 1
      %p330 = por %p328, %p329
      %p332 = scmp.ne.s32.totalorder %s315, %s331
      %p333 = scmp.eq.s32.totalorder %s29, 0
      %p334 = por %p332, %p333
      %p335 = scmp.le.s32.totalorder 1, %s23
      %p336 = scmp.lt.s32.totalorder %s23, 3
      %p337 = pnand %p335, %p336
      %p338 = pneg %p337
      // Predicated region
      $region9: #{decoder_forward_pallas.1} parent=5 // pred_check
        _
      $region10: #{decoder_forward_pallas.1} parent=5 // pred_check_branch
        %340 = sbr.rel (%p337) target = $region12
      $region11: #{decoder_forward_pallas.1} parent=5 // pred_region
        %s341 = ssub.s32 %s23, 1
        // Predicated region
        $region13: #{decoder_forward_pallas.1} parent=11 // pred_check
          %p342 = pneg %p70
        $region14: #{decoder_forward_pallas.1} parent=11 // pred_check_branch
          %344 = sbr.rel (%p342) target = $region16
        $region15: #{decoder_forward_pallas.1} parent=11 // pred_region
          _
        $region16: #{decoder_forward_pallas.1} parent=11 // pred_fallthru
          _
        // Predicated region
        $region17: #{decoder_forward_pallas.1} parent=11 // pred_check
          %p345 = pneg %p91
        $region18: #{decoder_forward_pallas.1} parent=11 // pred_check_branch
          %347 = sbr.rel (%p345) target = $region20
        $region19: #{decoder_forward_pallas.1} parent=11 // pred_region
          _
        $region20: #{decoder_forward_pallas.1} parent=11 // pred_fallthru
          _
        // Predicated region
        $region21: #{decoder_forward_pallas.1} parent=11 // pred_check
          %p348 = pneg %p112
        $region22: #{decoder_forward_pallas.1} parent=11 // pred_check_branch
          %350 = sbr.rel (%p348) target = $region24
        $region23: #{decoder_forward_pallas.1} parent=11 // pred_region
          _
        $region24: #{decoder_forward_pallas.1} parent=11 // pred_fallthru
          _
        // Predicated region
        $region25: #{decoder_forward_pallas.1} parent=11 // pred_check
          %p351 = pneg %p133
        $region26: #{decoder_forward_pallas.1} parent=11 // pred_check_branch
          %353 = sbr.rel (%p351) target = $region28
        $region27: #{decoder_forward_pallas.1} parent=11 // pred_region
          _
        $region28: #{decoder_forward_pallas.1} parent=11 // pred_fallthru
          _
        // Predicated region
        $region29: #{decoder_forward_pallas.1} parent=11 // pred_check
          %p354 = pneg %p154
        $region30: #{decoder_forward_pallas.1} parent=11 // pred_check_branch
          %356 = sbr.rel (%p354) target = $region32
        $region31: #{decoder_forward_pallas.1} parent=11 // pred_region
          _
        $region32: #{decoder_forward_pallas.1} parent=11 // pred_fallthru
          _
        // Predicated region
        $region33: #{decoder_forward_pallas.1} parent=11 // pred_check
          %p357 = pneg %p175
        $region34: #{decoder_forward_pallas.1} parent=11 // pred_check_branch
          %359 = sbr.rel (%p357) target = $region36
        $region35: #{decoder_forward_pallas.1} parent=11 // pred_region
          _
        $region36: #{decoder_forward_pallas.1} parent=11 // pred_fallthru
          _
        // Predicated region
        $region37: #{decoder_forward_pallas.1} parent=11 // pred_check
          %p360 = pneg %p196
        $region38: #{decoder_forward_pallas.1} parent=11 // pred_check_branch
          %362 = sbr.rel (%p360) target = $region40
        $region39: #{decoder_forward_pallas.1} parent=11 // pred_region
          _
        $region40: #{decoder_forward_pallas.1} parent=11 // pred_fallthru
          _
        // Predicated region
        $region41: #{decoder_forward_pallas.1} parent=11 // pred_check
          %p363 = pneg %p217
        $region42: #{decoder_forward_pallas.1} parent=11 // pred_check_branch
          %365 = sbr.rel (%p363) target = $region44
        $region43: #{decoder_forward_pallas.1} parent=11 // pred_region
          _
        $region44: #{decoder_forward_pallas.1} parent=11 // pred_fallthru
          _
        // Predicated region
        $region45: #{decoder_forward_pallas.1} parent=11 // pred_check
          %p366 = pneg %p238
        $region46: #{decoder_forward_pallas.1} parent=11 // pred_check_branch
          %368 = sbr.rel (%p366) target = $region48
        $region47: #{decoder_forward_pallas.1} parent=11 // pred_region
          %370 = vsyncadd [#allocation3], 0
          %s371 = sshll.u32 %s9, 4
          %s372 = int_to_ptr.hbm [resolvable:$true] %s371
          %s373 = sshll.u32 [#allocation2], 4
          %s374 = int_to_ptr.vmem [resolvable:$true] %s373
          %379 = dma.hbm_to_vmem [thread:$0]  %s372, 1024, %s374, [#allocation3], 128, 128, 8
        $region48: #{decoder_forward_pallas.1} parent=11 // pred_fallthru
          _
        // Predicated region
        $region49: #{decoder_forward_pallas.1} parent=11 // pred_check
          %p380 = pneg %p259
        $region50: #{decoder_forward_pallas.1} parent=11 // pred_check_branch
          %382 = sbr.rel (%p380) target = $region52
        $region51: #{decoder_forward_pallas.1} parent=11 // pred_region
          _
        $region52: #{decoder_forward_pallas.1} parent=11 // pred_fallthru
          _
        // Predicated region
        $region53: #{decoder_forward_pallas.1} parent=11 // pred_check
          %p383 = pneg %p280
        $region54: #{decoder_forward_pallas.1} parent=11 // pred_check_branch
          %385 = sbr.rel (%p383) target = $region56
        $region55: #{decoder_forward_pallas.1} parent=11 // pred_region
          _
        $region56: #{decoder_forward_pallas.1} parent=11 // pred_fallthru
          _
        // Predicated region
        $region57: #{decoder_forward_pallas.1} parent=11 // pred_check
          %p386 = pneg %p301
        $region58: #{decoder_forward_pallas.1} parent=11 // pred_check_branch
          %388 = sbr.rel (%p386) target = $region60
        $region59: #{decoder_forward_pallas.1} parent=11 // pred_region
          _
        $region60: #{decoder_forward_pallas.1} parent=11 // pred_fallthru
          _
      $region12: #{decoder_forward_pallas.1} parent=5 // pred_fallthru
        _
      %p389 = scmp.lt.s32.totalorder %s23, 2
      // Predicated region
      $region61: #{decoder_forward_pallas.1} parent=5 // pred_check
        %p390 = pneg %p389
      $region62: #{decoder_forward_pallas.1} parent=5 // pred_check_branch
        %392 = sbr.rel (%p390) target = $region64
      $region63: #{decoder_forward_pallas.1} parent=5 // pred_region
        // Predicated region
        $region65: #{decoder_forward_pallas.1} parent=63 // pred_check
          %p393 = pneg %p43
        $region66: #{decoder_forward_pallas.1} parent=63 // pred_check_branch
          %395 = sbr.rel (%p393) target = $region68
        $region67: #{decoder_forward_pallas.1} parent=63 // pred_region
          %p396 = scmp.lt.s32.totalorder %s23, 1
          %s397 = scalar_select %p396, %s23, 1
          %s398 = smul.addr %s397, 8
          %s399 = scalar_lea.vmem %s0, %s398
        $region68: #{decoder_forward_pallas.1} parent=63 // pred_fallthru
          _
      $region64: #{decoder_forward_pallas.1} parent=5 // pred_fallthru
        _
      %p400 = scmp.le.s32.totalorder 1, %s23
      %p401 = scmp.lt.s32.totalorder %s23, 3
      %p402 = pnand %p400, %p401
      %p403 = pneg %p402
      // Predicated region
      $region69: #{decoder_forward_pallas.1} parent=5 // pred_check
        _
      $region70: #{decoder_forward_pallas.1} parent=5 // pred_check_branch
        %405 = sbr.rel (%p402) target = $region72
      $region71: #{decoder_forward_pallas.1} parent=5 // pred_region
        %s406 = ssub.s32 %s23, 1
        // Predicated region
        $region73: #{decoder_forward_pallas.1} parent=71 // pred_check
          %p407 = pneg %p238
        $region74: #{decoder_forward_pallas.1} parent=71 // pred_check_branch
          %409 = sbr.rel (%p407) target = $region76
        $region75: #{decoder_forward_pallas.1} parent=71 // pred_region
          %411 = dma.done [#allocation3], 1024
        $region76: #{decoder_forward_pallas.1} parent=71 // pred_fallthru
          _
        %p412 = scmp.lt.s32.totalorder %s28, 1
        %s413 = scalar_select %p412, %s28, 1
        %s414 = smul.addr %s413, 8
        %s415 = scalar_lea.vmem %s0, %s414
        %p416 = pneg %p49
        %p417 = pneg %p46
        %p418 = pneg %p70
        %p419 = pneg %p67
        %p420 = pneg %p91
        %p421 = pneg %p88
        %p422 = pneg %p112
        %p423 = pneg %p109
        %p424 = pneg %p133
        %p425 = pneg %p130
        %p426 = pneg %p154
        %p427 = pneg %p151
        %p428 = pneg %p175
        %p429 = pneg %p172
        %p430 = pneg %p196
        %p431 = pneg %p193
        %p432 = pneg %p217
        %p433 = pneg %p214
        %p434 = pneg %p238
        %p435 = pneg %p235
        %p436 = pneg %p259
        %p437 = pneg %p256
        %p438 = pneg %p280
        %p439 = pneg %p277
        %p440 = pneg %p301
        %p441 = pneg %p298
        %p442 = pneg %p327
        %p443 = pneg %p324
        %s444 = sand.u32 %s314, 1
        %s445 = scalar_lea.sflag [#allocation4], %s444
        %s446 = sand.u32 %s314, 1
        %s447 = smul.addr %s446, 8
        %s448 = scalar_lea.vmem [#allocation5], %s447
        %p449 = scmp.lt.s32.totalorder %s28, 1
        %s450 = scalar_select %p449, %s28, 1
        %s451 = smul.addr %s450, 8
        %s452 = scalar_lea.vmem %s0, %s451
        %v453 = vld [vmem:[%s452] sm:$0xff]
        %v454 = vlaneseq
        %v455 = vand.u32 %v454, 127
        %456 = vset.pattern.permute.xlu0 0
        %457 = vperm.xlu0 %456, %v453
        %v458 = vpop.permute.xlu0 %457
        %vm459 = vcmp.eq.s32.totalorder %v455, %v458
        %v460 = vsel %vm459, 1, 0
        %v461 = vcvt.s32.f32 %v460
        %v462 = vld [vmem:[%s4] sm:$0xff]
        %v463 = vld [vmem:[%s4 + $0x8] sm:$0xff]
        %v464 = vld [vmem:[%s4 + $0x10] sm:$0xff]
        %v465 = vld [vmem:[%s4 + $0x18] sm:$0xff]
        %v466 = vld [vmem:[%s4 + $0x20] sm:$0xff]
        %v467 = vld [vmem:[%s4 + $0x28] sm:$0xff]
        %v468 = vld [vmem:[%s4 + $0x30] sm:$0xff]
        %v469 = vld [vmem:[%s4 + $0x38] sm:$0xff]
        %vm470 = vcmask 523264
        %v472 = vsel %vm470, %v461, 0
        %474 = vmatpush.msra.mxu0 0.0
        %475 = vmatpush.msra.mxu0 0.0
        %476 = vmatpush.msra.mxu0 0.0
        %477 = vmatpush.msra.mxu0 0.0
        %478 = vmatpush.msra.mxu0 0.0
        %479 = vmatpush.msra.mxu0 0.0
        %480 = vmatpush.msra.mxu0 0.0
        %481 = vmatpush.msra.mxu0 0.0
        %482 = vmatpush.msra.mxu0 %v469
        %483 = vmatpush.msra.mxu0 %v468
        %484 = vmatpush.msra.mxu0 %v467
        %485 = vmatpush.msra.mxu0 %v466
        %486 = vmatpush.msra.mxu0 %v465
        %487 = vmatpush.msra.mxu0 %v464
        %488 = vmatpush.msra.mxu0 %v463
        %489 = vmatpush.msra.mxu0 %v462
        %490 = vmatmul.f32.gmra.mxu0 %v472
        %v491 = vpop.f32.mrf.mxu0
        %v492 = vadd.f32 0.0, %v491
        %493 = vdwg.mxu0
        %v494 = vld [vmem:[%s1] sm:$0xff]
        %v495 = vld [vmem:[%s2] sm:$0xff]
        %v496 = vld [vmem:[%s3] sm:$0xff]
        %v497 = vld [vmem:[%s3 + $0x8] sm:$0xff]
        %v498 = vld [vmem:[%s3 + $0x10] sm:$0xff]
        %v499 = vld [vmem:[%s3 + $0x18] sm:$0xff]
        %v500 = vld [vmem:[%s3 + $0x20] sm:$0xff]
        %v501 = vld [vmem:[%s3 + $0x28] sm:$0xff]
        %v502 = vld [vmem:[%s3 + $0x30] sm:$0xff]
        %v503 = vld [vmem:[%s3 + $0x38] sm:$0xff]
        %v504 = vlaneseq
        %v505 = vshrl.u32 %v504, 7
        %vm506 = vcmp.le.s32.totalorder %v455, %v505
        %v507 = vld [vmem:[%s5] sm:$0x1]
        %v508 = vmul.f32 %v492, %v492
        %vm509 = vcmask 261120
        %v510 = vsel %vm509, %v508, 0.0
        %511 = vadd.xlane.f32.xlu0 %v510
        %v512 = vpop.xlane.xlu0 %511
        %v513 = vrcp.pop 32.0
        %v514 = vmul.f32 32.0, %v513
        %v515 = vsub.f32 1.0, %v514
        %v516 = vmul.f32 %v513, %v515
        %v517 = vadd.f32 %v513, %v516
        %vm518 = vweird.f32 %v513
        %v519 = vsel %vm518, %v513, %v517
        %v520 = vmul.f32 %v512, %v519
        %v521 = vadd.f32 %v520, 1e-06
        %v522 = vrsqrt.pop %v521
        %v523 = vmul.f32 %v522, %v521
        %v524 = vmul.f32 %v523, %v522
        %v525 = vmul.f32 0.5, %v524
        %v526 = vsub.f32 1.5, %v525
        %v527 = vmul.f32 %v522, %v526
        %vm528 = vweird.f32 %v521
        %vm529 = vweird.f32 %v522
        %vm530 = vmor %vm528, %vm529
        %v531 = vsel %vm530, %v522, %v527
        %v532 = vmul.f32 %v492, %v531
        %v534 = vperm.slane %v507, 0
        %v536 = vmul.f32 %v532, %v534
        %v537 = vld [vmem:[%s6] sm:$0xff]
        %v538 = vld [vmem:[%s6 + $0x8] sm:$0xff]
        %v539 = vld [vmem:[%s6 + $0x10] sm:$0xff]
        %v540 = vld [vmem:[%s6 + $0x18] sm:$0xff]
        %v542 = vsel %vm509, %v536, 0
        %544 = vmatpush.msra.mxu0 0.0
        %545 = vmatpush.msra.mxu0 0.0
        %546 = vmatpush.msra.mxu0 0.0
        %547 = vmatpush.msra.mxu0 0.0
        %548 = vmatpush.msra.mxu0 0.0
        %549 = vmatpush.msra.mxu0 0.0
        %550 = vmatpush.msra.mxu0 0.0
        %551 = vmatpush.msra.mxu0 0.0
        %552 = vmatpush.msra.mxu0 0.0
        %553 = vmatpush.msra.mxu0 0.0
        %554 = vmatpush.msra.mxu0 0.0
        %555 = vmatpush.msra.mxu0 0.0
        %556 = vmatpush.msra.mxu0 %v540
        %557 = vmatpush.msra.mxu0 %v539
        %558 = vmatpush.msra.mxu0 %v538
        %559 = vmatpush.msra.mxu0 %v537
        %560 = vmatmul.f32.gmra.mxu0 %v542
        %v561 = vpop.f32.mrf.mxu0
        %v562 = vadd.f32 0.0, %v561
        %563 = vdwg.mxu0
        %v564 = vmul.f32 %v562, %v494
        %v566 = vsel %vm470, %v562, 0
        %568 = vmatpush.msra.mxu0 0.0
        %569 = vmatpush.msra.mxu0 0.0
        %570 = vmatpush.msra.mxu0 0.0
        %571 = vmatpush.msra.mxu0 0.0
        %572 = vmatpush.msra.mxu0 0.0
        %573 = vmatpush.msra.mxu0 0.0
        %574 = vmatpush.msra.mxu0 0.0
        %575 = vmatpush.msra.mxu0 0.0
        %576 = vmatpush.msra.mxu0 %v503
        %577 = vmatpush.msra.mxu0 %v502
        %578 = vmatpush.msra.mxu0 %v501
        %579 = vmatpush.msra.mxu0 %v500
        %580 = vmatpush.msra.mxu0 %v499
        %581 = vmatpush.msra.mxu0 %v498
        %582 = vmatpush.msra.mxu0 %v497
        %583 = vmatpush.msra.mxu0 %v496
        %584 = vmatmul.f32.gmra.mxu0 %v566
        %v585 = vpop.f32.mrf.mxu0
        %v586 = vadd.f32 0.0, %v585
        %587 = vdwg.mxu0
        %v588 = vmul.f32 %v586, %v495
        %v589 = vadd.f32 %v564, %v588
        %591 = vrot.lane.b32.xlu0 %v589, 96
        %v592 = vpop.permute.xlu0 %591
        %vm593 = vcmask 64512
        %v594 = vsel %vm593, %v589, 0
        %v596 = vsel %vm593, %v592, 0
        %598 = vmatpush.xpose.msra.mxu0 0.0
        %599 = vmatpush.xpose.msra.mxu0 0.0
        %600 = vmatpush.xpose.msra.mxu0 0.0
        %601 = vmatpush.xpose.msra.mxu0 0.0
        %602 = vmatpush.xpose.msra.mxu0 0.0
        %603 = vmatpush.xpose.msra.mxu0 0.0
        %604 = vmatpush.xpose.msra.mxu0 0.0
        %605 = vmatpush.xpose.msra.mxu0 0.0
        %606 = vmatpush.xpose.msra.mxu0 0.0
        %607 = vmatpush.xpose.msra.mxu0 0.0
        %608 = vmatpush.xpose.msra.mxu0 0.0
        %609 = vmatpush.xpose.msra.mxu0 0.0
        %610 = vmatpush.xpose.msra.mxu0 0.0
        %611 = vmatpush.xpose.msra.mxu0 0.0
        %612 = vmatpush.xpose.msra.mxu0 0.0
        %613 = vmatpush.xpose.msra.mxu0 %v596
        %614 = vmatmul.f32.gmra.mxu0 %v594
        %v615 = vpop.f32.mrf.mxu0
        %v616 = vadd.f32 0.0, %v615
        %617 = vdwg.mxu0
        %v618 = vmul.f32 %v616, 0.35355338
        %v619 = vsel %vm506, %v618, -1e+30
        %v620 = vsel %vm593, %v619, -inf
        %621 = vmax.xlane.f32.xlu0 %v620
        %v622 = vpop.xlane.xlu0 %621
        %v623 = vsub.f32 %v619, %v622
        %v624 = vmul.f32 %v623, 1.442695
        %v625 = vpow.pop %v624
        %v626 = vsel %vm593, %v625, 0.0
        %627 = vadd.xlane.f32.xlu0 %v626
        %v628 = vpop.xlane.xlu0 %627
        %629 = vrot.lane.b32.xlu0 %v589, 80
        %v630 = vpop.permute.xlu0 %629
        %v633 = vsel %vm593, %v625, 0
        %635 = vmatpush.msra.mxu0 0.0
        %636 = vmatpush.msra.mxu0 0.0
        %637 = vmatpush.msra.mxu0 0.0
        %638 = vmatpush.msra.mxu0 0.0
        %639 = vmatpush.msra.mxu0 0.0
        %640 = vmatpush.msra.mxu0 0.0
        %641 = vmatpush.msra.mxu0 0.0
        %642 = vmatpush.msra.mxu0 0.0
        %643 = vmatpush.msra.mxu0 0.0
        %644 = vmatpush.msra.mxu0 0.0
        %645 = vmatpush.msra.mxu0 0.0
        %646 = vmatpush.msra.mxu0 0.0
        %647 = vmatpush.msra.mxu0 0.0
        %648 = vmatpush.msra.mxu0 0.0
        %649 = vmatpush.msra.mxu0 0.0
        %650 = vmatpush.msra.mxu0 %v630
        %651 = vmatmul.f32.gmra.mxu0 %v633
        %v652 = vpop.f32.mrf.mxu0
        %v653 = vadd.f32 0.0, %v652
        %654 = vdwg.mxu0
        %v655 = vrcp.pop %v628
        %v656 = vmul.f32 %v628, %v655
        %v657 = vsub.f32 1.0, %v656
        %v658 = vmul.f32 %v655, %v657
        %v659 = vadd.f32 %v655, %v658
        %vm660 = vweird.f32 %v628
        %vm661 = vweird.f32 %v655
        %vm662 = vmor %vm660, %vm661
        %v663 = vsel %vm662, %v655, %v659
        %v664 = vand.u32 2147483647, %v628
        %vm665 = vcmp.eq.f32.partialorder %v664, 8.507059e+37
        %v666 = vand.u32 %v628, 2147483648
        %v667 = vor.u32 1.1754944e-38, %v666
        %v668 = vsel %vm665, %v667, %v663
        %v669 = vmul.f32 %v653, %v668
        %670 = vrot.lane.b32.xlu0 %v589, 120
        %v671 = vpop.permute.xlu0 %670
        %v672 = vsel %vm593, %v671, 0
        %674 = vmatpush.xpose.msra.mxu0 0.0
        %675 = vmatpush.xpose.msra.mxu0 0.0
        %676 = vmatpush.xpose.msra.mxu0 0.0
        %677 = vmatpush.xpose.msra.mxu0 0.0
        %678 = vmatpush.xpose.msra.mxu0 0.0
        %679 = vmatpush.xpose.msra.mxu0 0.0
        %680 = vmatpush.xpose.msra.mxu0 0.0
        %681 = vmatpush.xpose.msra.mxu0 0.0
        %682 = vmatpush.xpose.msra.mxu0 0.0
        %683 = vmatpush.xpose.msra.mxu0 0.0
        %684 = vmatpush.xpose.msra.mxu0 0.0
        %685 = vmatpush.xpose.msra.mxu0 0.0
        %686 = vmatpush.xpose.msra.mxu0 0.0
        %687 = vmatpush.xpose.msra.mxu0 0.0
        %688 = vmatpush.xpose.msra.mxu0 0.0
        %689 = vmatpush.xpose.msra.mxu0 %v596
        %690 = vmatmul.f32.gmra.mxu0 %v672
        %v691 = vpop.f32.mrf.mxu0
        %v692 = vadd.f32 0.0, %v691
        %693 = vdwg.mxu0
        %v694 = vmul.f32 %v692, 0.35355338
        %v695 = vsel %vm506, %v694, -1e+30
        %v696 = vsel %vm593, %v695, -inf
        %697 = vmax.xlane.f32.xlu0 %v696
        %v698 = vpop.xlane.xlu0 %697
        %v699 = vsub.f32 %v695, %v698
        %v700 = vmul.f32 %v699, 1.442695
        %v701 = vpow.pop %v700
        %v702 = vsel %vm593, %v701, 0.0
        %703 = vadd.xlane.f32.xlu0 %v702
        %v704 = vpop.xlane.xlu0 %703
        %v706 = vsel %vm593, %v701, 0
        %708 = vmatpush.msra.mxu0 0.0
        %709 = vmatpush.msra.mxu0 0.0
        %710 = vmatpush.msra.mxu0 0.0
        %711 = vmatpush.msra.mxu0 0.0
        %712 = vmatpush.msra.mxu0 0.0
        %713 = vmatpush.msra.mxu0 0.0
        %714 = vmatpush.msra.mxu0 0.0
        %715 = vmatpush.msra.mxu0 0.0
        %716 = vmatpush.msra.mxu0 0.0
        %717 = vmatpush.msra.mxu0 0.0
        %718 = vmatpush.msra.mxu0 0.0
        %719 = vmatpush.msra.mxu0 0.0
        %720 = vmatpush.msra.mxu0 0.0
        %721 = vmatpush.msra.mxu0 0.0
        %722 = vmatpush.msra.mxu0 0.0
        %723 = vmatpush.msra.mxu0 %v630
        %724 = vmatmul.f32.gmra.mxu0 %v706
        %v725 = vpop.f32.mrf.mxu0
        %v726 = vadd.f32 0.0, %v725
        %727 = vdwg.mxu0
        %v728 = vrcp.pop %v704
        %v729 = vmul.f32 %v704, %v728
        %v730 = vsub.f32 1.0, %v729
        %v731 = vmul.f32 %v728, %v730
        %v732 = vadd.f32 %v728, %v731
        %vm733 = vweird.f32 %v704
        %vm734 = vweird.f32 %v728
        %vm735 = vmor %vm733, %vm734
        %v736 = vsel %vm735, %v728, %v732
        %v737 = vand.u32 2147483647, %v704
        %vm738 = vcmp.eq.f32.partialorder %v737, 8.507059e+37
        %v739 = vand.u32 %v704, 2147483648
        %v740 = vor.u32 1.1754944e-38, %v739
        %v741 = vsel %vm738, %v740, %v736
        %v742 = vmul.f32 %v726, %v741
        %743 = vrot.lane.b32.xlu0 %v589, 112
        %v744 = vpop.permute.xlu0 %743
        %745 = vrot.lane.b32.xlu0 %v589, 88
        %v746 = vpop.permute.xlu0 %745
        %v747 = vsel %vm593, %v744, 0
        %v749 = vsel %vm593, %v746, 0
        %751 = vmatpush.xpose.msra.mxu0 0.0
        %752 = vmatpush.xpose.msra.mxu0 0.0
        %753 = vmatpush.xpose.msra.mxu0 0.0
        %754 = vmatpush.xpose.msra.mxu0 0.0
        %755 = vmatpush.xpose.msra.mxu0 0.0
        %756 = vmatpush.xpose.msra.mxu0 0.0
        %757 = vmatpush.xpose.msra.mxu0 0.0
        %758 = vmatpush.xpose.msra.mxu0 0.0
        %759 = vmatpush.xpose.msra.mxu0 0.0
        %760 = vmatpush.xpose.msra.mxu0 0.0
        %761 = vmatpush.xpose.msra.mxu0 0.0
        %762 = vmatpush.xpose.msra.mxu0 0.0
        %763 = vmatpush.xpose.msra.mxu0 0.0
        %764 = vmatpush.xpose.msra.mxu0 0.0
        %765 = vmatpush.xpose.msra.mxu0 0.0
        %766 = vmatpush.xpose.msra.mxu0 %v749
        %767 = vmatmul.f32.gmra.mxu0 %v747
        %v768 = vpop.f32.mrf.mxu0
        %v769 = vadd.f32 0.0, %v768
        %770 = vdwg.mxu0
        %v771 = vmul.f32 %v769, 0.35355338
        %v772 = vsel %vm506, %v771, -1e+30
        %v773 = vsel %vm593, %v772, -inf
        %774 = vmax.xlane.f32.xlu0 %v773
        %v775 = vpop.xlane.xlu0 %774
        %v776 = vsub.f32 %v772, %v775
        %v777 = vmul.f32 %v776, 1.442695
        %v778 = vpow.pop %v777
        %v779 = vsel %vm593, %v778, 0.0
        %780 = vadd.xlane.f32.xlu0 %v779
        %v781 = vpop.xlane.xlu0 %780
        %782 = vrot.lane.b32.xlu0 %v589, 72
        %v783 = vpop.permute.xlu0 %782
        %v786 = vsel %vm593, %v778, 0
        %788 = vmatpush.msra.mxu0 0.0
        %789 = vmatpush.msra.mxu0 0.0
        %790 = vmatpush.msra.mxu0 0.0
        %791 = vmatpush.msra.mxu0 0.0
        %792 = vmatpush.msra.mxu0 0.0
        %793 = vmatpush.msra.mxu0 0.0
        %794 = vmatpush.msra.mxu0 0.0
        %795 = vmatpush.msra.mxu0 0.0
        %796 = vmatpush.msra.mxu0 0.0
        %797 = vmatpush.msra.mxu0 0.0
        %798 = vmatpush.msra.mxu0 0.0
        %799 = vmatpush.msra.mxu0 0.0
        %800 = vmatpush.msra.mxu0 0.0
        %801 = vmatpush.msra.mxu0 0.0
        %802 = vmatpush.msra.mxu0 0.0
        %803 = vmatpush.msra.mxu0 %v783
        %804 = vmatmul.f32.gmra.mxu0 %v786
        %v805 = vpop.f32.mrf.mxu0
        %v806 = vadd.f32 0.0, %v805
        %807 = vdwg.mxu0
        %v808 = vrcp.pop %v781
        %v809 = vmul.f32 %v781, %v808
        %v810 = vsub.f32 1.0, %v809
        %v811 = vmul.f32 %v808, %v810
        %v812 = vadd.f32 %v808, %v811
        %vm813 = vweird.f32 %v781
        %vm814 = vweird.f32 %v808
        %vm815 = vmor %vm813, %vm814
        %v816 = vsel %vm815, %v808, %v812
        %v817 = vand.u32 2147483647, %v781
        %vm818 = vcmp.eq.f32.partialorder %v817, 8.507059e+37
        %v819 = vand.u32 %v781, 2147483648
        %v820 = vor.u32 1.1754944e-38, %v819
        %v821 = vsel %vm818, %v820, %v816
        %v822 = vmul.f32 %v806, %v821
        %823 = vrot.lane.b32.xlu0 %v589, 104
        %v824 = vpop.permute.xlu0 %823
        %v825 = vsel %vm593, %v824, 0
        %827 = vmatpush.xpose.msra.mxu0 0.0
        %828 = vmatpush.xpose.msra.mxu0 0.0
        %829 = vmatpush.xpose.msra.mxu0 0.0
        %830 = vmatpush.xpose.msra.mxu0 0.0
        %831 = vmatpush.xpose.msra.mxu0 0.0
        %832 = vmatpush.xpose.msra.mxu0 0.0
        %833 = vmatpush.xpose.msra.mxu0 0.0
        %834 = vmatpush.xpose.msra.mxu0 0.0
        %835 = vmatpush.xpose.msra.mxu0 0.0
        %836 = vmatpush.xpose.msra.mxu0 0.0
        %837 = vmatpush.xpose.msra.mxu0 0.0
        %838 = vmatpush.xpose.msra.mxu0 0.0
        %839 = vmatpush.xpose.msra.mxu0 0.0
        %840 = vmatpush.xpose.msra.mxu0 0.0
        %841 = vmatpush.xpose.msra.mxu0 0.0
        %842 = vmatpush.xpose.msra.mxu0 %v749
        %843 = vmatmul.f32.gmra.mxu0 %v825
        %v844 = vpop.f32.mrf.mxu0
        %v845 = vadd.f32 0.0, %v844
        %846 = vdwg.mxu0
        %v847 = vmul.f32 %v845, 0.35355338
        %v848 = vsel %vm506, %v847, -1e+30
        %v849 = vsel %vm593, %v848, -inf
        %850 = vmax.xlane.f32.xlu0 %v849
        %v851 = vpop.xlane.xlu0 %850
        %v852 = vsub.f32 %v848, %v851
        %v853 = vmul.f32 %v852, 1.442695
        %v854 = vpow.pop %v853
        %v855 = vsel %vm593, %v854, 0.0
        %856 = vadd.xlane.f32.xlu0 %v855
        %v857 = vpop.xlane.xlu0 %856
        %v859 = vsel %vm593, %v854, 0
        %861 = vmatpush.msra.mxu0 0.0
        %862 = vmatpush.msra.mxu0 0.0
        %863 = vmatpush.msra.mxu0 0.0
        %864 = vmatpush.msra.mxu0 0.0
        %865 = vmatpush.msra.mxu0 0.0
        %866 = vmatpush.msra.mxu0 0.0
        %867 = vmatpush.msra.mxu0 0.0
        %868 = vmatpush.msra.mxu0 0.0
        %869 = vmatpush.msra.mxu0 0.0
        %870 = vmatpush.msra.mxu0 0.0
        %871 = vmatpush.msra.mxu0 0.0
        %872 = vmatpush.msra.mxu0 0.0
        %873 = vmatpush.msra.mxu0 0.0
        %874 = vmatpush.msra.mxu0 0.0
        %875 = vmatpush.msra.mxu0 0.0
        %876 = vmatpush.msra.mxu0 %v783
        %877 = vmatmul.f32.gmra.mxu0 %v859
        %v878 = vpop.f32.mrf.mxu0
        %v879 = vadd.f32 0.0, %v878
        %880 = vdwg.mxu0
        %v881 = vrcp.pop %v857
        %v882 = vmul.f32 %v857, %v881
        %v883 = vsub.f32 1.0, %v882
        %v884 = vmul.f32 %v881, %v883
        %v885 = vadd.f32 %v881, %v884
        %vm886 = vweird.f32 %v857
        %vm887 = vweird.f32 %v881
        %vm888 = vmor %vm886, %vm887
        %v889 = vsel %vm888, %v881, %v885
        %v890 = vand.u32 2147483647, %v857
        %vm891 = vcmp.eq.f32.partialorder %v890, 8.507059e+37
        %v892 = vand.u32 %v857, 2147483648
        %v893 = vor.u32 1.1754944e-38, %v892
        %v894 = vsel %vm891, %v893, %v889
        %v895 = vmul.f32 %v879, %v894
        %897 = vrot.lane.b32.xlu0 %v742, 8
        %v898 = vpop.permute.xlu0 %897
        %901 = vrot.lane.b32.xlu0 %v822, 16
        %v902 = vpop.permute.xlu0 %901
        %905 = vrot.lane.b32.xlu0 %v895, 24
        %v906 = vpop.permute.xlu0 %905
        %v908 = vsel %vm593, %v669, %v898
        %vm909 = vcmask 130048
        %v910 = vsel %vm909, %v908, %v902
        %vm911 = vcmask 195584
        %v912 = vsel %vm911, %v910, %v906
        %v913 = vld [vmem:[%s7] sm:$0xff]
        %v914 = vld [vmem:[%s7 + $0x8] sm:$0xff]
        %v915 = vld [vmem:[%s7 + $0x10] sm:$0xff]
        %v916 = vld [vmem:[%s7 + $0x18] sm:$0xff]
        %v918 = vsel %vm509, %v912, 0
        %920 = vmatpush.msra.mxu0 0.0
        %921 = vmatpush.msra.mxu0 0.0
        %922 = vmatpush.msra.mxu0 0.0
        %923 = vmatpush.msra.mxu0 0.0
        %924 = vmatpush.msra.mxu0 0.0
        %925 = vmatpush.msra.mxu0 0.0
        %926 = vmatpush.msra.mxu0 0.0
        %927 = vmatpush.msra.mxu0 0.0
        %928 = vmatpush.msra.mxu0 0.0
        %929 = vmatpush.msra.mxu0 0.0
        %930 = vmatpush.msra.mxu0 0.0
        %931 = vmatpush.msra.mxu0 0.0
        %932 = vmatpush.msra.mxu0 %v916
        %933 = vmatpush.msra.mxu0 %v915
        %934 = vmatpush.msra.mxu0 %v914
        %935 = vmatpush.msra.mxu0 %v913
        %936 = vmatmul.f32.gmra.mxu0 %v918
        %v937 = vpop.f32.mrf.mxu0
        %v938 = vadd.f32 0.0, %v937
        %939 = vdwg.mxu0
        %v940 = vadd.f32 %v492, %v938
        %v941 = vld [vmem:[%s8] sm:$0x1]
        %v942 = vmul.f32 %v940, %v940
        %v943 = vsel %vm509, %v942, 0.0
        %944 = vadd.xlane.f32.xlu0 %v943
        %v945 = vpop.xlane.xlu0 %944
        %v946 = vmul.f32 %v945, %v519
        %v947 = vadd.f32 %v946, 1e-06
        %v948 = vrsqrt.pop %v947
        %v949 = vmul.f32 %v948, %v947
        %v950 = vmul.f32 %v949, %v948
        %v951 = vmul.f32 0.5, %v950
        %v952 = vsub.f32 1.5, %v951
        %v953 = vmul.f32 %v948, %v952
        %vm954 = vweird.f32 %v947
        %vm955 = vweird.f32 %v948
        %vm956 = vmor %vm954, %vm955
        %v957 = vsel %vm956, %v948, %v953
        %v958 = vmul.f32 %v940, %v957
        %v960 = vperm.slane %v941, 0
        %v962 = vmul.f32 %v958, %v960
        %v963 = vld [vmem:[#allocation2] sm:$0xff]
        %v964 = vld [vmem:[#allocation2 + $0x8] sm:$0xff]
        %v965 = vld [vmem:[#allocation2 + $0x10] sm:$0xff]
        %v966 = vld [vmem:[#allocation2 + $0x18] sm:$0xff]
        %v968 = vsel %vm509, %v962, 0
        %970 = vmatpush.msra.mxu0 0.0
        %971 = vmatpush.msra.mxu0 0.0
        %972 = vmatpush.msra.mxu0 0.0
        %973 = vmatpush.msra.mxu0 0.0
        %974 = vmatpush.msra.mxu0 0.0
        %975 = vmatpush.msra.mxu0 0.0
        %976 = vmatpush.msra.mxu0 0.0
        %977 = vmatpush.msra.mxu0 0.0
        %978 = vmatpush.msra.mxu0 0.0
        %979 = vmatpush.msra.mxu0 0.0
        %980 = vmatpush.msra.mxu0 0.0
        %981 = vmatpush.msra.mxu0 0.0
        %982 = vmatpush.msra.mxu0 %v966
        %983 = vmatpush.msra.mxu0 %v965
        %984 = vmatpush.msra.mxu0 %v964
        %985 = vmatpush.msra.mxu0 %v963
        %986 = vmatmul.f32.gmra.mxu0 %v968
        %v987 = vpop.f32.mrf.mxu0
        %v988 = vadd.f32 0.0, %v987
        %989 = vdwg.mxu0
        %v990 = vxor.u32 %v988, 2147483648
        %v991 = vmul.f32 %v990, 1.442695
        %v992 = vpow.pop %v991
        %v993 = vadd.f32 %v992, 1.0
        %v994 = vrcp.pop %v993
        %v995 = vmul.f32 %v993, %v994
        %v996 = vsub.f32 1.0, %v995
        %v997 = vmul.f32 %v994, %v996
        %v998 = vadd.f32 %v994, %v997
        %vm999 = vweird.f32 %v993
        %vm1000 = vweird.f32 %v994
        %vm1001 = vmor %vm999, %vm1000
        %v1002 = vsel %vm1001, %v994, %v998
        %v1003 = vand.u32 2147483647, %v993
        %vm1004 = vcmp.eq.f32.partialorder %v1003, 8.507059e+37
        %v1005 = vand.u32 %v993, 2147483648
        %v1006 = vor.u32 1.1754944e-38, %v1005
        %v1007 = vsel %vm1004, %v1006, %v1002
        %v1008 = vmul.f32 1.0, %v1007
        %v1009 = vmul.f32 %v988, %v1008
        %1011 = vrot.lane.b32.xlu0 %v988, 64
        %v1012 = vpop.permute.xlu0 %1011
        %v1014 = vmul.f32 %v1009, %v1012
        %v1015 = vld [vmem:[%s10] sm:$0xff]
        %v1016 = vld [vmem:[%s10 + $0x8] sm:$0xff]
        %v1017 = vld [vmem:[%s10 + $0x10] sm:$0xff]
        %v1018 = vld [vmem:[%s10 + $0x18] sm:$0xff]
        %v1019 = vld [vmem:[%s10 + $0x20] sm:$0xff]
        %v1020 = vld [vmem:[%s10 + $0x28] sm:$0xff]
        %v1021 = vld [vmem:[%s10 + $0x30] sm:$0xff]
        %v1022 = vld [vmem:[%s10 + $0x38] sm:$0xff]
        %v1024 = vsel %vm470, %v1014, 0
        %1026 = vmatpush.msra.mxu0 0.0
        %1027 = vmatpush.msra.mxu0 0.0
        %1028 = vmatpush.msra.mxu0 0.0
        %1029 = vmatpush.msra.mxu0 0.0
        %1030 = vmatpush.msra.mxu0 0.0
        %1031 = vmatpush.msra.mxu0 0.0
        %1032 = vmatpush.msra.mxu0 0.0
        %1033 = vmatpush.msra.mxu0 0.0
        %1034 = vmatpush.msra.mxu0 %v1022
        %1035 = vmatpush.msra.mxu0 %v1021
        %1036 = vmatpush.msra.mxu0 %v1020
        %1037 = vmatpush.msra.mxu0 %v1019
        %1038 = vmatpush.msra.mxu0 %v1018
        %1039 = vmatpush.msra.mxu0 %v1017
        %1040 = vmatpush.msra.mxu0 %v1016
        %1041 = vmatpush.msra.mxu0 %v1015
        %1042 = vmatmul.f32.gmra.mxu0 %v1024
        %v1043 = vpop.f32.mrf.mxu0
        %v1044 = vadd.f32 0.0, %v1043
        %1045 = vdwg.mxu0
        %v1046 = vadd.f32 %v940, %v1044
        %s1047 = scalar_lea.vmem %s5, 1
        %v1048 = vld [vmem:[%s1047] sm:$0x1]
        %v1049 = vmul.f32 %v1046, %v1046
        %v1050 = vsel %vm509, %v1049, 0.0
        %1051 = vadd.xlane.f32.xlu0 %v1050
        %v1052 = vpop.xlane.xlu0 %1051
        %v1053 = vmul.f32 %v1052, %v519
        %v1054 = vadd.f32 %v1053, 1e-06
        %v1055 = vrsqrt.pop %v1054
        %v1056 = vmul.f32 %v1055, %v1054
        %v1057 = vmul.f32 %v1056, %v1055
        %v1058 = vmul.f32 0.5, %v1057
        %v1059 = vsub.f32 1.5, %v1058
        %v1060 = vmul.f32 %v1055, %v1059
        %vm1061 = vweird.f32 %v1054
        %vm1062 = vweird.f32 %v1055
        %vm1063 = vmor %vm1061, %vm1062
        %v1064 = vsel %vm1063, %v1055, %v1060
        %v1065 = vmul.f32 %v1046, %v1064
        %v1067 = vperm.slane %v1048, 0
        %v1069 = vmul.f32 %v1065, %v1067
        %s1070 = scalar_lea.vmem %s6, 32
        %v1071 = vld [vmem:[%s1070] sm:$0xff]
        %v1072 = vld [vmem:[%s1070 + $0x8] sm:$0xff]
        %v1073 = vld [vmem:[%s1070 + $0x10] sm:$0xff]
        %v1074 = vld [vmem:[%s1070 + $0x18] sm:$0xff]
        %v1076 = vsel %vm509, %v1069, 0
        %1078 = vmatpush.msra.mxu0 0.0
        %1079 = vmatpush.msra.mxu0 0.0
        %1080 = vmatpush.msra.mxu0 0.0
        %1081 = vmatpush.msra.mxu0 0.0
        %1082 = vmatpush.msra.mxu0 0.0
        %1083 = vmatpush.msra.mxu0 0.0
        %1084 = vmatpush.msra.mxu0 0.0
        %1085 = vmatpush.msra.mxu0 0.0
        %1086 = vmatpush.msra.mxu0 0.0
        %1087 = vmatpush.msra.mxu0 0.0
        %1088 = vmatpush.msra.mxu0 0.0
        %1089 = vmatpush.msra.mxu0 0.0
        %1090 = vmatpush.msra.mxu0 %v1074
        %1091 = vmatpush.msra.mxu0 %v1073
        %1092 = vmatpush.msra.mxu0 %v1072
        %1093 = vmatpush.msra.mxu0 %v1071
        %1094 = vmatmul.f32.gmra.mxu0 %v1076
        %v1095 = vpop.f32.mrf.mxu0
        %v1096 = vadd.f32 0.0, %v1095
        %1097 = vdwg.mxu0
        %v1098 = vmul.f32 %v1096, %v494
        %v1100 = vsel %vm470, %v1096, 0
        %1102 = vmatpush.msra.mxu0 0.0
        %1103 = vmatpush.msra.mxu0 0.0
        %1104 = vmatpush.msra.mxu0 0.0
        %1105 = vmatpush.msra.mxu0 0.0
        %1106 = vmatpush.msra.mxu0 0.0
        %1107 = vmatpush.msra.mxu0 0.0
        %1108 = vmatpush.msra.mxu0 0.0
        %1109 = vmatpush.msra.mxu0 0.0
        %1110 = vmatpush.msra.mxu0 %v503
        %1111 = vmatpush.msra.mxu0 %v502
        %1112 = vmatpush.msra.mxu0 %v501
        %1113 = vmatpush.msra.mxu0 %v500
        %1114 = vmatpush.msra.mxu0 %v499
        %1115 = vmatpush.msra.mxu0 %v498
        %1116 = vmatpush.msra.mxu0 %v497
        %1117 = vmatpush.msra.mxu0 %v496
        %1118 = vmatmul.f32.gmra.mxu0 %v1100
        %v1119 = vpop.f32.mrf.mxu0
        %v1120 = vadd.f32 0.0, %v1119
        %1121 = vdwg.mxu0
        %v1122 = vmul.f32 %v1120, %v495
        %v1123 = vadd.f32 %v1098, %v1122
        %1125 = vrot.lane.b32.xlu0 %v1123, 96
        %v1126 = vpop.permute.xlu0 %1125
        %v1127 = vsel %vm593, %v1123, 0
        %v1129 = vsel %vm593, %v1126, 0
        %1131 = vmatpush.xpose.msra.mxu0 0.0
        %1132 = vmatpush.xpose.msra.mxu0 0.0
        %1133 = vmatpush.xpose.msra.mxu0 0.0
        %1134 = vmatpush.xpose.msra.mxu0 0.0
        %1135 = vmatpush.xpose.msra.mxu0 0.0
        %1136 = vmatpush.xpose.msra.mxu0 0.0
        %1137 = vmatpush.xpose.msra.mxu0 0.0
        %1138 = vmatpush.xpose.msra.mxu0 0.0
        %1139 = vmatpush.xpose.msra.mxu0 0.0
        %1140 = vmatpush.xpose.msra.mxu0 0.0
        %1141 = vmatpush.xpose.msra.mxu0 0.0
        %1142 = vmatpush.xpose.msra.mxu0 0.0
        %1143 = vmatpush.xpose.msra.mxu0 0.0
        %1144 = vmatpush.xpose.msra.mxu0 0.0
        %1145 = vmatpush.xpose.msra.mxu0 0.0
        %1146 = vmatpush.xpose.msra.mxu0 %v1129
        %1147 = vmatmul.f32.gmra.mxu0 %v1127
        %v1148 = vpop.f32.mrf.mxu0
        %v1149 = vadd.f32 0.0, %v1148
        %1150 = vdwg.mxu0
        %v1151 = vmul.f32 %v1149, 0.35355338
        %v1152 = vsel %vm506, %v1151, -1e+30
        %v1153 = vsel %vm593, %v1152, -inf
        %1154 = vmax.xlane.f32.xlu0 %v1153
        %v1155 = vpop.xlane.xlu0 %1154
        %v1156 = vsub.f32 %v1152, %v1155
        %v1157 = vmul.f32 %v1156, 1.442695
        %v1158 = vpow.pop %v1157
        %v1159 = vsel %vm593, %v1158, 0.0
        %1160 = vadd.xlane.f32.xlu0 %v1159
        %v1161 = vpop.xlane.xlu0 %1160
        %1162 = vrot.lane.b32.xlu0 %v1123, 80
        %v1163 = vpop.permute.xlu0 %1162
        %v1166 = vsel %vm593, %v1158, 0
        %1168 = vmatpush.msra.mxu0 0.0
        %1169 = vmatpush.msra.mxu0 0.0
        %1170 = vmatpush.msra.mxu0 0.0
        %1171 = vmatpush.msra.mxu0 0.0
        %1172 = vmatpush.msra.mxu0 0.0
        %1173 = vmatpush.msra.mxu0 0.0
        %1174 = vmatpush.msra.mxu0 0.0
        %1175 = vmatpush.msra.mxu0 0.0
        %1176 = vmatpush.msra.mxu0 0.0
        %1177 = vmatpush.msra.mxu0 0.0
        %1178 = vmatpush.msra.mxu0 0.0
        %1179 = vmatpush.msra.mxu0 0.0
        %1180 = vmatpush.msra.mxu0 0.0
        %1181 = vmatpush.msra.mxu0 0.0
        %1182 = vmatpush.msra.mxu0 0.0
        %1183 = vmatpush.msra.mxu0 %v1163
        %1184 = vmatmul.f32.gmra.mxu0 %v1166
        %v1185 = vpop.f32.mrf.mxu0
        %v1186 = vadd.f32 0.0, %v1185
        %1187 = vdwg.mxu0
        %v1188 = vrcp.pop %v1161
        %v1189 = vmul.f32 %v1161, %v1188
        %v1190 = vsub.f32 1.0, %v1189
        %v1191 = vmul.f32 %v1188, %v1190
        %v1192 = vadd.f32 %v1188, %v1191
        %vm1193 = vweird.f32 %v1161
        %vm1194 = vweird.f32 %v1188
        %vm1195 = vmor %vm1193, %vm1194
        %v1196 = vsel %vm1195, %v1188, %v1192
        %v1197 = vand.u32 2147483647, %v1161
        %vm1198 = vcmp.eq.f32.partialorder %v1197, 8.507059e+37
        %v1199 = vand.u32 %v1161, 2147483648
        %v1200 = vor.u32 1.1754944e-38, %v1199
        %v1201 = vsel %vm1198, %v1200, %v1196
        %v1202 = vmul.f32 %v1186, %v1201
        %1203 = vrot.lane.b32.xlu0 %v1123, 120
        %v1204 = vpop.permute.xlu0 %1203
        %v1205 = vsel %vm593, %v1204, 0
        %1207 = vmatpush.xpose.msra.mxu0 0.0
        %1208 = vmatpush.xpose.msra.mxu0 0.0
        %1209 = vmatpush.xpose.msra.mxu0 0.0
        %1210 = vmatpush.xpose.msra.mxu0 0.0
        %1211 = vmatpush.xpose.msra.mxu0 0.0
        %1212 = vmatpush.xpose.msra.mxu0 0.0
        %1213 = vmatpush.xpose.msra.mxu0 0.0
        %1214 = vmatpush.xpose.msra.mxu0 0.0
        %1215 = vmatpush.xpose.msra.mxu0 0.0
        %1216 = vmatpush.xpose.msra.mxu0 0.0
        %1217 = vmatpush.xpose.msra.mxu0 0.0
        %1218 = vmatpush.xpose.msra.mxu0 0.0
        %1219 = vmatpush.xpose.msra.mxu0 0.0
        %1220 = vmatpush.xpose.msra.mxu0 0.0
        %1221 = vmatpush.xpose.msra.mxu0 0.0
        %1222 = vmatpush.xpose.msra.mxu0 %v1129
        %1223 = vmatmul.f32.gmra.mxu0 %v1205
        %v1224 = vpop.f32.mrf.mxu0
        %v1225 = vadd.f32 0.0, %v1224
        %1226 = vdwg.mxu0
        %v1227 = vmul.f32 %v1225, 0.35355338
        %v1228 = vsel %vm506, %v1227, -1e+30
        %v1229 = vsel %vm593, %v1228, -inf
        %1230 = vmax.xlane.f32.xlu0 %v1229
        %v1231 = vpop.xlane.xlu0 %1230
        %v1232 = vsub.f32 %v1228, %v1231
        %v1233 = vmul.f32 %v1232, 1.442695
        %v1234 = vpow.pop %v1233
        %v1235 = vsel %vm593, %v1234, 0.0
        %1236 = vadd.xlane.f32.xlu0 %v1235
        %v1237 = vpop.xlane.xlu0 %1236
        %v1239 = vsel %vm593, %v1234, 0
        %1241 = vmatpush.msra.mxu0 0.0
        %1242 = vmatpush.msra.mxu0 0.0
        %1243 = vmatpush.msra.mxu0 0.0
        %1244 = vmatpush.msra.mxu0 0.0
        %1245 = vmatpush.msra.mxu0 0.0
        %1246 = vmatpush.msra.mxu0 0.0
        %1247 = vmatpush.msra.mxu0 0.0
        %1248 = vmatpush.msra.mxu0 0.0
        %1249 = vmatpush.msra.mxu0 0.0
        %1250 = vmatpush.msra.mxu0 0.0
        %1251 = vmatpush.msra.mxu0 0.0
        %1252 = vmatpush.msra.mxu0 0.0
        %1253 = vmatpush.msra.mxu0 0.0
        %1254 = vmatpush.msra.mxu0 0.0
        %1255 = vmatpush.msra.mxu0 0.0
        %1256 = vmatpush.msra.mxu0 %v1163
        %1257 = vmatmul.f32.gmra.mxu0 %v1239
        %v1258 = vpop.f32.mrf.mxu0
        %v1259 = vadd.f32 0.0, %v1258
        %1260 = vdwg.mxu0
        %v1261 = vrcp.pop %v1237
        %v1262 = vmul.f32 %v1237, %v1261
        %v1263 = vsub.f32 1.0, %v1262
        %v1264 = vmul.f32 %v1261, %v1263
        %v1265 = vadd.f32 %v1261, %v1264
        %vm1266 = vweird.f32 %v1237
        %vm1267 = vweird.f32 %v1261
        %vm1268 = vmor %vm1266, %vm1267
        %v1269 = vsel %vm1268, %v1261, %v1265
        %v1270 = vand.u32 2147483647, %v1237
        %vm1271 = vcmp.eq.f32.partialorder %v1270, 8.507059e+37
        %v1272 = vand.u32 %v1237, 2147483648
        %v1273 = vor.u32 1.1754944e-38, %v1272
        %v1274 = vsel %vm1271, %v1273, %v1269
        %v1275 = vmul.f32 %v1259, %v1274
        %1276 = vrot.lane.b32.xlu0 %v1123, 112
        %v1277 = vpop.permute.xlu0 %1276
        %1278 = vrot.lane.b32.xlu0 %v1123, 88
        %v1279 = vpop.permute.xlu0 %1278
        %v1280 = vsel %vm593, %v1277, 0
        %v1282 = vsel %vm593, %v1279, 0
        %1284 = vmatpush.xpose.msra.mxu0 0.0
        %1285 = vmatpush.xpose.msra.mxu0 0.0
        %1286 = vmatpush.xpose.msra.mxu0 0.0
        %1287 = vmatpush.xpose.msra.mxu0 0.0
        %1288 = vmatpush.xpose.msra.mxu0 0.0
        %1289 = vmatpush.xpose.msra.mxu0 0.0
        %1290 = vmatpush.xpose.msra.mxu0 0.0
        %1291 = vmatpush.xpose.msra.mxu0 0.0
        %1292 = vmatpush.xpose.msra.mxu0 0.0
        %1293 = vmatpush.xpose.msra.mxu0 0.0
        %1294 = vmatpush.xpose.msra.mxu0 0.0
        %1295 = vmatpush.xpose.msra.mxu0 0.0
        %1296 = vmatpush.xpose.msra.mxu0 0.0
        %1297 = vmatpush.xpose.msra.mxu0 0.0
        %1298 = vmatpush.xpose.msra.mxu0 0.0
        %1299 = vmatpush.xpose.msra.mxu0 %v1282
        %1300 = vmatmul.f32.gmra.mxu0 %v1280
        %v1301 = vpop.f32.mrf.mxu0
        %v1302 = vadd.f32 0.0, %v1301
        %1303 = vdwg.mxu0
        %v1304 = vmul.f32 %v1302, 0.35355338
        %v1305 = vsel %vm506, %v1304, -1e+30
        %v1306 = vsel %vm593, %v1305, -inf
        %1307 = vmax.xlane.f32.xlu0 %v1306
        %v1308 = vpop.xlane.xlu0 %1307
        %v1309 = vsub.f32 %v1305, %v1308
        %v1310 = vmul.f32 %v1309, 1.442695
        %v1311 = vpow.pop %v1310
        %v1312 = vsel %vm593, %v1311, 0.0
        %1313 = vadd.xlane.f32.xlu0 %v1312
        %v1314 = vpop.xlane.xlu0 %1313
        %1315 = vrot.lane.b32.xlu0 %v1123, 72
        %v1316 = vpop.permute.xlu0 %1315
        %v1319 = vsel %vm593, %v1311, 0
        %1321 = vmatpush.msra.mxu0 0.0
        %1322 = vmatpush.msra.mxu0 0.0
        %1323 = vmatpush.msra.mxu0 0.0
        %1324 = vmatpush.msra.mxu0 0.0
        %1325 = vmatpush.msra.mxu0 0.0
        %1326 = vmatpush.msra.mxu0 0.0
        %1327 = vmatpush.msra.mxu0 0.0
        %1328 = vmatpush.msra.mxu0 0.0
        %1329 = vmatpush.msra.mxu0 0.0
        %1330 = vmatpush.msra.mxu0 0.0
        %1331 = vmatpush.msra.mxu0 0.0
        %1332 = vmatpush.msra.mxu0 0.0
        %1333 = vmatpush.msra.mxu0 0.0
        %1334 = vmatpush.msra.mxu0 0.0
        %1335 = vmatpush.msra.mxu0 0.0
        %1336 = vmatpush.msra.mxu0 %v1316
        %1337 = vmatmul.f32.gmra.mxu0 %v1319
        %v1338 = vpop.f32.mrf.mxu0
        %v1339 = vadd.f32 0.0, %v1338
        %1340 = vdwg.mxu0
        %v1341 = vrcp.pop %v1314
        %v1342 = vmul.f32 %v1314, %v1341
        %v1343 = vsub.f32 1.0, %v1342
        %v1344 = vmul.f32 %v1341, %v1343
        %v1345 = vadd.f32 %v1341, %v1344
        %vm1346 = vweird.f32 %v1314
        %vm1347 = vweird.f32 %v1341
        %vm1348 = vmor %vm1346, %vm1347
        %v1349 = vsel %vm1348, %v1341, %v1345
        %v1350 = vand.u32 2147483647, %v1314
        %vm1351 = vcmp.eq.f32.partialorder %v1350, 8.507059e+37
        %v1352 = vand.u32 %v1314, 2147483648
        %v1353 = vor.u32 1.1754944e-38, %v1352
        %v1354 = vsel %vm1351, %v1353, %v1349
        %v1355 = vmul.f32 %v1339, %v1354
        %1356 = vrot.lane.b32.xlu0 %v1123, 104
        %v1357 = vpop.permute.xlu0 %1356
        %v1358 = vsel %vm593, %v1357, 0
        %1360 = vmatpush.xpose.msra.mxu0 0.0
        %1361 = vmatpush.xpose.msra.mxu0 0.0
        %1362 = vmatpush.xpose.msra.mxu0 0.0
        %1363 = vmatpush.xpose.msra.mxu0 0.0
        %1364 = vmatpush.xpose.msra.mxu0 0.0
        %1365 = vmatpush.xpose.msra.mxu0 0.0
        %1366 = vmatpush.xpose.msra.mxu0 0.0
        %1367 = vmatpush.xpose.msra.mxu0 0.0
        %1368 = vmatpush.xpose.msra.mxu0 0.0
        %1369 = vmatpush.xpose.msra.mxu0 0.0
        %1370 = vmatpush.xpose.msra.mxu0 0.0
        %1371 = vmatpush.xpose.msra.mxu0 0.0
        %1372 = vmatpush.xpose.msra.mxu0 0.0
        %1373 = vmatpush.xpose.msra.mxu0 0.0
        %1374 = vmatpush.xpose.msra.mxu0 0.0
        %1375 = vmatpush.xpose.msra.mxu0 %v1282
        %1376 = vmatmul.f32.gmra.mxu0 %v1358
        %v1377 = vpop.f32.mrf.mxu0
        %v1378 = vadd.f32 0.0, %v1377
        %1379 = vdwg.mxu0
        %v1380 = vmul.f32 %v1378, 0.35355338
        %v1381 = vsel %vm506, %v1380, -1e+30
        %v1382 = vsel %vm593, %v1381, -inf
        %1383 = vmax.xlane.f32.xlu0 %v1382
        %v1384 = vpop.xlane.xlu0 %1383
        %v1385 = vsub.f32 %v1381, %v1384
        %v1386 = vmul.f32 %v1385, 1.442695
        %v1387 = vpow.pop %v1386
        %v1388 = vsel %vm593, %v1387, 0.0
        %1389 = vadd.xlane.f32.xlu0 %v1388
        %v1390 = vpop.xlane.xlu0 %1389
        %v1392 = vsel %vm593, %v1387, 0
        %1394 = vmatpush.msra.mxu0 0.0
        %1395 = vmatpush.msra.mxu0 0.0
        %1396 = vmatpush.msra.mxu0 0.0
        %1397 = vmatpush.msra.mxu0 0.0
        %1398 = vmatpush.msra.mxu0 0.0
        %1399 = vmatpush.msra.mxu0 0.0
        %1400 = vmatpush.msra.mxu0 0.0
        %1401 = vmatpush.msra.mxu0 0.0
        %1402 = vmatpush.msra.mxu0 0.0
        %1403 = vmatpush.msra.mxu0 0.0
        %1404 = vmatpush.msra.mxu0 0.0
        %1405 = vmatpush.msra.mxu0 0.0
        %1406 = vmatpush.msra.mxu0 0.0
        %1407 = vmatpush.msra.mxu0 0.0
        %1408 = vmatpush.msra.mxu0 0.0
        %1409 = vmatpush.msra.mxu0 %v1316
        %1410 = vmatmul.f32.gmra.mxu0 %v1392
        %v1411 = vpop.f32.mrf.mxu0
        %v1412 = vadd.f32 0.0, %v1411
        %1413 = vdwg.mxu0
        %v1414 = vrcp.pop %v1390
        %v1415 = vmul.f32 %v1390, %v1414
        %v1416 = vsub.f32 1.0, %v1415
        %v1417 = vmul.f32 %v1414, %v1416
        %v1418 = vadd.f32 %v1414, %v1417
        %vm1419 = vweird.f32 %v1390
        %vm1420 = vweird.f32 %v1414
        %vm1421 = vmor %vm1419, %vm1420
        %v1422 = vsel %vm1421, %v1414, %v1418
        %v1423 = vand.u32 2147483647, %v1390
        %vm1424 = vcmp.eq.f32.partialorder %v1423, 8.507059e+37
        %v1425 = vand.u32 %v1390, 2147483648
        %v1426 = vor.u32 1.1754944e-38, %v1425
        %v1427 = vsel %vm1424, %v1426, %v1422
        %v1428 = vmul.f32 %v1412, %v1427
        %1430 = vrot.lane.b32.xlu0 %v1275, 8
        %v1431 = vpop.permute.xlu0 %1430
        %1434 = vrot.lane.b32.xlu0 %v1355, 16
        %v1435 = vpop.permute.xlu0 %1434
        %1438 = vrot.lane.b32.xlu0 %v1428, 24
        %v1439 = vpop.permute.xlu0 %1438
        %v1441 = vsel %vm593, %v1202, %v1431
        %v1442 = vsel %vm909, %v1441, %v1435
        %v1443 = vsel %vm911, %v1442, %v1439
        %s1444 = scalar_lea.vmem %s7, 32
        %v1445 = vld [vmem:[%s1444] sm:$0xff]
        %v1446 = vld [vmem:[%s1444 + $0x8] sm:$0xff]
        %v1447 = vld [vmem:[%s1444 + $0x10] sm:$0xff]
        %v1448 = vld [vmem:[%s1444 + $0x18] sm:$0xff]
        %v1450 = vsel %vm509, %v1443, 0
        %1452 = vmatpush.msra.mxu0 0.0
        %1453 = vmatpush.msra.mxu0 0.0
        %1454 = vmatpush.msra.mxu0 0.0
        %1455 = vmatpush.msra.mxu0 0.0
        %1456 = vmatpush.msra.mxu0 0.0
        %1457 = vmatpush.msra.mxu0 0.0
        %1458 = vmatpush.msra.mxu0 0.0
        %1459 = vmatpush.msra.mxu0 0.0
        %1460 = vmatpush.msra.mxu0 0.0
        %1461 = vmatpush.msra.mxu0 0.0
        %1462 = vmatpush.msra.mxu0 0.0
        %1463 = vmatpush.msra.mxu0 0.0
        %1464 = vmatpush.msra.mxu0 %v1448
        %1465 = vmatpush.msra.mxu0 %v1447
        %1466 = vmatpush.msra.mxu0 %v1446
        %1467 = vmatpush.msra.mxu0 %v1445
        %1468 = vmatmul.f32.gmra.mxu0 %v1450
        %v1469 = vpop.f32.mrf.mxu0
        %v1470 = vadd.f32 0.0, %v1469
        %1471 = vdwg.mxu0
        %v1472 = vadd.f32 %v1046, %v1470
        %s1473 = scalar_lea.vmem %s8, 1
        %v1474 = vld [vmem:[%s1473] sm:$0x1]
        %v1475 = vmul.f32 %v1472, %v1472
        %v1476 = vsel %vm509, %v1475, 0.0
        %1477 = vadd.xlane.f32.xlu0 %v1476
        %v1478 = vpop.xlane.xlu0 %1477
        %v1479 = vmul.f32 %v1478, %v519
        %v1480 = vadd.f32 %v1479, 1e-06
        %v1481 = vrsqrt.pop %v1480
        %v1482 = vmul.f32 %v1481, %v1480
        %v1483 = vmul.f32 %v1482, %v1481
        %v1484 = vmul.f32 0.5, %v1483
        %v1485 = vsub.f32 1.5, %v1484
        %v1486 = vmul.f32 %v1481, %v1485
        %vm1487 = vweird.f32 %v1480
        %vm1488 = vweird.f32 %v1481
        %vm1489 = vmor %vm1487, %vm1488
        %v1490 = vsel %vm1489, %v1481, %v1486
        %v1491 = vmul.f32 %v1472, %v1490
        %v1493 = vperm.slane %v1474, 0
        %v1495 = vmul.f32 %v1491, %v1493
        %s1496 = scalar_lea.vmem [#allocation2], 32
        %v1497 = vld [vmem:[%s1496] sm:$0xff]
        %v1498 = vld [vmem:[%s1496 + $0x8] sm:$0xff]
        %v1499 = vld [vmem:[%s1496 + $0x10] sm:$0xff]
        %v1500 = vld [vmem:[%s1496 + $0x18] sm:$0xff]
        %v1502 = vsel %vm509, %v1495, 0
        %1504 = vmatpush.msra.mxu0 0.0
        %1505 = vmatpush.msra.mxu0 0.0
        %1506 = vmatpush.msra.mxu0 0.0
        %1507 = vmatpush.msra.mxu0 0.0
        %1508 = vmatpush.msra.mxu0 0.0
        %1509 = vmatpush.msra.mxu0 0.0
        %1510 = vmatpush.msra.mxu0 0.0
        %1511 = vmatpush.msra.mxu0 0.0
        %1512 = vmatpush.msra.mxu0 0.0
        %1513 = vmatpush.msra.mxu0 0.0
        %1514 = vmatpush.msra.mxu0 0.0
        %1515 = vmatpush.msra.mxu0 0.0
        %1516 = vmatpush.msra.mxu0 %v1500
        %1517 = vmatpush.msra.mxu0 %v1499
        %1518 = vmatpush.msra.mxu0 %v1498
        %1519 = vmatpush.msra.mxu0 %v1497
        %1520 = vmatmul.f32.gmra.mxu0 %v1502
        %v1521 = vpop.f32.mrf.mxu0
        %v1522 = vadd.f32 0.0, %v1521
        %1523 = vdwg.mxu0
        %v1524 = vxor.u32 %v1522, 2147483648
        %v1525 = vmul.f32 %v1524, 1.442695
        %v1526 = vpow.pop %v1525
        %v1527 = vadd.f32 %v1526, 1.0
        %v1528 = vrcp.pop %v1527
        %v1529 = vmul.f32 %v1527, %v1528
        %v1530 = vsub.f32 1.0, %v1529
        %v1531 = vmul.f32 %v1528, %v1530
        %v1532 = vadd.f32 %v1528, %v1531
        %vm1533 = vweird.f32 %v1527
        %vm1534 = vweird.f32 %v1528
        %vm1535 = vmor %vm1533, %vm1534
        %v1536 = vsel %vm1535, %v1528, %v1532
        %v1537 = vand.u32 2147483647, %v1527
        %vm1538 = vcmp.eq.f32.partialorder %v1537, 8.507059e+37
        %v1539 = vand.u32 %v1527, 2147483648
        %v1540 = vor.u32 1.1754944e-38, %v1539
        %v1541 = vsel %vm1538, %v1540, %v1536
        %v1542 = vmul.f32 1.0, %v1541
        %v1543 = vmul.f32 %v1522, %v1542
        %1545 = vrot.lane.b32.xlu0 %v1522, 64
        %v1546 = vpop.permute.xlu0 %1545
        %v1548 = vmul.f32 %v1543, %v1546
        %s1549 = scalar_lea.vmem %s10, 64
        %v1550 = vld [vmem:[%s1549] sm:$0xff]
        %v1551 = vld [vmem:[%s1549 + $0x8] sm:$0xff]
        %v1552 = vld [vmem:[%s1549 + $0x10] sm:$0xff]
        %v1553 = vld [vmem:[%s1549 + $0x18] sm:$0xff]
        %v1554 = vld [vmem:[%s1549 + $0x20] sm:$0xff]
        %v1555 = vld [vmem:[%s1549 + $0x28] sm:$0xff]
        %v1556 = vld [vmem:[%s1549 + $0x30] sm:$0xff]
        %v1557 = vld [vmem:[%s1549 + $0x38] sm:$0xff]
        %v1559 = vsel %vm470, %v1548, 0
        %1561 = vmatpush.msra.mxu0 0.0
        %1562 = vmatpush.msra.mxu0 0.0
        %1563 = vmatpush.msra.mxu0 0.0
        %1564 = vmatpush.msra.mxu0 0.0
        %1565 = vmatpush.msra.mxu0 0.0
        %1566 = vmatpush.msra.mxu0 0.0
        %1567 = vmatpush.msra.mxu0 0.0
        %1568 = vmatpush.msra.mxu0 0.0
        %1569 = vmatpush.msra.mxu0 %v1557
        %1570 = vmatpush.msra.mxu0 %v1556
        %1571 = vmatpush.msra.mxu0 %v1555
        %1572 = vmatpush.msra.mxu0 %v1554
        %1573 = vmatpush.msra.mxu0 %v1553
        %1574 = vmatpush.msra.mxu0 %v1552
        %1575 = vmatpush.msra.mxu0 %v1551
        %1576 = vmatpush.msra.mxu0 %v1550
        %1577 = vmatmul.f32.gmra.mxu0 %v1559
        %v1578 = vpop.f32.mrf.mxu0
        %v1579 = vadd.f32 0.0, %v1578
        %1580 = vdwg.mxu0
        %v1581 = vadd.f32 %v1472, %v1579
        %v1582 = vld [vmem:[%s11] sm:$0x1]
        %v1583 = vmul.f32 %v1581, %v1581
        %v1584 = vsel %vm509, %v1583, 0.0
        %1585 = vadd.xlane.f32.xlu0 %v1584
        %v1586 = vpop.xlane.xlu0 %1585
        %v1587 = vmul.f32 %v1586, %v519
        %v1588 = vadd.f32 %v1587, 1e-06
        %v1589 = vrsqrt.pop %v1588
        %v1590 = vmul.f32 %v1589, %v1588
        %v1591 = vmul.f32 %v1590, %v1589
        %v1592 = vmul.f32 0.5, %v1591
        %v1593 = vsub.f32 1.5, %v1592
        %v1594 = vmul.f32 %v1589, %v1593
        %vm1595 = vweird.f32 %v1588
        %vm1596 = vweird.f32 %v1589
        %vm1597 = vmor %vm1595, %vm1596
        %v1598 = vsel %vm1597, %v1589, %v1594
        %v1599 = vmul.f32 %v1581, %v1598
        %v1601 = vperm.slane %v1582, 0
        %v1603 = vmul.f32 %v1599, %v1601
        %v1604 = vld [vmem:[%s12] sm:$0xff]
        %v1605 = vld [vmem:[%s12 + $0x8] sm:$0xff]
        %v1606 = vld [vmem:[%s12 + $0x10] sm:$0xff]
        %v1607 = vld [vmem:[%s12 + $0x18] sm:$0xff]
        %v1609 = vsel %vm509, %v1603, 0
        %1611 = vmatpush.msra.mxu0 0.0
        %1612 = vmatpush.msra.mxu0 0.0
        %1613 = vmatpush.msra.mxu0 0.0
        %1614 = vmatpush.msra.mxu0 0.0
        %1615 = vmatpush.msra.mxu0 0.0
        %1616 = vmatpush.msra.mxu0 0.0
        %1617 = vmatpush.msra.mxu0 0.0
        %1618 = vmatpush.msra.mxu0 0.0
        %1619 = vmatpush.msra.mxu0 0.0
        %1620 = vmatpush.msra.mxu0 0.0
        %1621 = vmatpush.msra.mxu0 0.0
        %1622 = vmatpush.msra.mxu0 0.0
        %1623 = vmatpush.msra.mxu0 %v1607
        %1624 = vmatpush.msra.mxu0 %v1606
        %1625 = vmatpush.msra.mxu0 %v1605
        %1626 = vmatpush.msra.mxu0 %v1604
        %1627 = vmatmul.f32.gmra.mxu0 %v1609
        %v1628 = vpop.f32.mrf.mxu0
        %v1629 = vadd.f32 0.0, %v1628
        %1630 = vdwg.mxu0
        %1631 = vst.msk [vmem:[%s448] sm:$0xff] %vm470, %v1629
        %s1632 = sand.u32 %s314, 1
        %s1633 = scalar_lea.sflag [#allocation4], %s1632
        %s1634 = sand.u32 %s314, 1
        %s1635 = smul.addr %s1634, 8
        %s1636 = scalar_lea.vmem [#allocation5], %s1635
        // Predicated region
        $region77: #{decoder_forward_pallas.1} parent=71 // pred_check
          %p1637 = pneg %p324
        $region78: #{decoder_forward_pallas.1} parent=71 // pred_check_branch
          %1639 = sbr.rel (%p1637) target = $region80
        $region79: #{decoder_forward_pallas.1} parent=71 // pred_region
          %1641 = vsyncadd %s1633, 0
          %s1642 = smul.addr %s28, 8
          %s1643 = scalar_lea.hbm %s13, %s1642
          %s1645 = sshll.u32 %s1636, 4
          %s1646 = int_to_ptr.vmem [resolvable:$true] %s1645
          %s1647 = sshll.u32 %s1643, 4
          %s1648 = int_to_ptr.hbm [resolvable:$true] %s1647
          %1650 = dma.vmem_to_hbm [thread:$0]  %s1646, 128, %s1648, %s1633
        $region80: #{decoder_forward_pallas.1} parent=71 // pred_fallthru
          _
      $region72: #{decoder_forward_pallas.1} parent=5 // pred_fallthru
        _
      %p1651 = scmp.le.s32.totalorder 2, %s23
      // Predicated region
      $region81: #{decoder_forward_pallas.1} parent=5 // pred_check
        %p1652 = pneg %p1651
      $region82: #{decoder_forward_pallas.1} parent=5 // pred_check_branch
        %1654 = sbr.rel (%p1652) target = $region84
      $region83: #{decoder_forward_pallas.1} parent=5 // pred_region
        %s1655 = ssub.s32 %s23, 2
        // Predicated region
        $region85: #{decoder_forward_pallas.1} parent=83 // pred_check
          %p1656 = pneg %p330
        $region86: #{decoder_forward_pallas.1} parent=83 // pred_check_branch
          %1658 = sbr.rel (%p1656) target = $region88
        $region87: #{decoder_forward_pallas.1} parent=83 // pred_region
          %s1659 = sand.u32 %s315, 1
          %s1660 = scalar_lea.sflag [#allocation4], %s1659
          %s1661 = sand.u32 %s315, 1
          %s1662 = smul.addr %s1661, 8
          %s1663 = scalar_lea.vmem [#allocation5], %s1662
          %1665 = dma.done %s1660, 128
        $region88: #{decoder_forward_pallas.1} parent=83 // pred_fallthru
          _
      $region84: #{decoder_forward_pallas.1} parent=5 // pred_fallthru
        _
    $region6: #{decoder_forward_pallas.1} parent=1 // loop_footer
      %s27 = sadd.s32 1, %s23
    $region7: #{decoder_forward_pallas.1} parent=1 // loop_footer_branch
      %22 = sbr.rel target = $region3
    $region8: #{decoder_forward_pallas.1} parent=1 // loop_exit
      _
    %1666 = vsyncpa [#allocation3], 1
    %s1667 = scalar_lea.sflag [#allocation3], 1
    %1668 = vsyncpa %s1667, 1
    %1669 = vsyncpa [#allocation4], 1
    %s1670 = scalar_lea.sflag [#allocation4], 1
    %1671 = vsyncpa %s1670, 1

</llo_original>
